<compile_context>
chip_gen: v5e
topology: v5e:2x2
jax: 0.10.0
libtpu: 0.0.40
codegen_flags: <defaults>
</compile_context>

<pallas_src>
import jax
import jax.numpy as jnp
from jax.experimental import pallas as pl
from jax.experimental.pallas import tpu as pltpu


def _ae_kernel(x_ref,
               w1_ref, b1_ref,
               w2_ref, b2_ref,
               w34_ref, b34_ref,
               o_ref):
    """Fused forward pass for one batch tile, entirely in VMEM.

    Dots run on the MXU with f32 accumulation; bias-add / ReLU / sigmoid stay
    in f32 (important on v5e, which has no bf16 VPU/EUP path).
    """
    x = x_ref[...]

    # encoder layer 1: Linear + ReLU
    h1 = jnp.dot(x, w1_ref[...], preferred_element_type=jnp.float32) + b1_ref[...]
    h1 = jnp.maximum(h1, 0.0)

    # encoder layer 2: Linear + ReLU
    h2 = jnp.dot(h1.astype(w2_ref.dtype), w2_ref[...],
                 preferred_element_type=jnp.float32) + b2_ref[...]
    h2 = jnp.maximum(h2, 0.0)

    # decoder (two Linears fused into one precomputed matrix) + Sigmoid
    logits = jnp.dot(h2.astype(w34_ref.dtype), w34_ref[...],
                     preferred_element_type=jnp.float32) + b34_ref[...]
    o_ref[...] = jax.nn.sigmoid(logits).astype(o_ref.dtype)


def _round_up(v, m):
    return -(-v // m) * m


def _pick_batch_tile(B, in_dim, itemsize, target=256):
    """Large-but-bounded batch tile: multiple of 8, capped so the streamed
    x-in + out tiles (double-buffered) stay well inside v7x's VMEM budget."""
    budget_bytes = 8 << 20                           # stream budget (v7x-safe)
    cap = budget_bytes // (4 * in_dim * itemsize)    # 2 streams x 2 buffers
    tile = min(target, _round_up(B, 8), max(cap, 8))
    return max(8, (tile // 8) * 8)                   # multiple of 8 (sublane)


def autoencoder_forward(x, params, *, batch_tile=None, compute_dtype=None):
    """x: (B, in_dim).  params: dict of (in,out) weights + (1,out) biases.

    compute_dtype: dtype used for the streamed x / weights and the matmul
    operands (e.g. jnp.bfloat16 on v6e/v7x). Accumulation and elementwise math
    stay f32. Output dtype == compute_dtype.
    """
    B, in_dim = x.shape
    h1 = params["w1"].shape[1]
    h2 = params["w2"].shape[1]

    if compute_dtype is None:
        compute_dtype = x.dtype
    itemsize = jnp.dtype(compute_dtype).itemsize

    if batch_tile is None:
        batch_tile = _pick_batch_tile(B, in_dim, itemsize)
    assert batch_tile % 8 == 0, "batch_tile must be a multiple of 8"

    # Pad batch so it divides evenly into tiles (pad rows are sliced off).
    B_pad = _round_up(B, batch_tile)
    x_c = x.astype(compute_dtype)
    if B_pad != B:
        x_c = jnp.pad(x_c, ((0, B_pad - B), (0, 0)))

    # Cast weights for streaming; keep biases (elementwise path) in f32.
    f32 = jnp.float32
    w1 = params["w1"].astype(compute_dtype)
    w2 = params["w2"].astype(compute_dtype)
    b1 = params["b1"].astype(f32)
    b2 = params["b2"].astype(f32)
    # Fuse the two activation-free decoder Linears (exact, done in f32 once).
    w34 = (params["w3"].astype(f32) @ params["w4"].astype(f32)).astype(compute_dtype)
    b34 = params["b3"].astype(f32) @ params["w4"].astype(f32) + params["b4"].astype(f32)

    full = lambda shape: pl.BlockSpec(shape, lambda i: (0, 0))
    grid = (B_pad // batch_tile,)

    out = pl.pallas_call(
        _ae_kernel,
        out_shape=jax.ShapeDtypeStruct((B_pad, in_dim), compute_dtype),
        grid_spec=pl.GridSpec(
            grid=grid,
            in_specs=[
                pl.BlockSpec((batch_tile, in_dim), lambda i: (i, 0)),   # x tile
                full((in_dim, h1)), full((1, h1)),                      # enc L1
                full((h1, h2)),     full((1, h2)),                      # enc L2
                full((h2, in_dim)), full((1, in_dim)),                  # fused decoder
            ],
            out_specs=pl.BlockSpec((batch_tile, in_dim), lambda i: (i, 0)),
        ),
        compiler_params=pltpu.CompilerParams(
            dimension_semantics=("parallel",)),
    )(x_c, w1, b1, w2, b2, w34, b34)

    return out[:B] if B_pad != B else out


def init_params(key, in_dim, h_dim1, h_dim2, dtype=jnp.float32):
    """PyTorch-style uniform(-1/sqrt(fan_in), 1/sqrt(fan_in)) init.

    Weights are stored transposed, shape (fan_in, fan_out).
    """
    def linear(k, fan_in, fan_out):
        kw, kb = jax.random.split(k)
        bound = 1.0 / jnp.sqrt(fan_in)
        w = jax.random.uniform(kw, (fan_in, fan_out), dtype, -bound, bound)
        b = jax.random.uniform(kb, (1, fan_out), dtype, -bound, bound)
        return w, b

    k1, k2, k3, k4 = jax.random.split(key, 4)
    w1, b1 = linear(k1, in_dim, h_dim1)   # encoder.0
    w2, b2 = linear(k2, h_dim1, h_dim2)   # encoder.2
    w3, b3 = linear(k3, h_dim2, h_dim1)   # decoder.0
    w4, b4 = linear(k4, h_dim1, in_dim)   # decoder.1
    return dict(w1=w1, b1=b1, w2=w2, b2=b2, w3=w3, b3=b3, w4=w4, b4=b4)


def reference_forward(x, p):
    h = jnp.maximum(x @ p["w1"] + p["b1"], 0.0)
    h = jnp.maximum(h @ p["w2"] + p["b2"], 0.0)
    d = h @ p["w3"] + p["b3"]
    return jax.nn.sigmoid(d @ p["w4"] + p["b4"])


if __name__ == "__main__":
    # Shapes consistent with Autoencoder(in_dim, h_dim1, h_dim2); batch large
    # enough to exercise the multi-step batch grid (default tile=256 -> 4 steps).
    B, IN_DIM, H1, H2 = 1024, 256, 32, 16

    key = jax.random.PRNGKey(0)
    kx, kp = jax.random.split(key)
    x = jax.random.normal(kx, (B, IN_DIM), jnp.float32)
    params = init_params(kp, IN_DIM, H1, H2)

    ref = reference_forward(x, params)

    # f32 path (tight correctness check)
    out = jax.block_until_ready(autoencoder_forward(x, params))
    assert out.shape == (B, IN_DIM)
    assert jnp.allclose(out, ref, atol=1e-4, rtol=1e-4)

    # bf16-streaming path (v6e/v7x memory-bandwidth optimization), loose check
    out_bf16 = jax.block_until_ready(
        autoencoder_forward(x, params, compute_dtype=jnp.bfloat16))
    assert out_bf16.dtype == jnp.bfloat16
    assert jnp.allclose(out_bf16.astype(jnp.float32), ref, atol=5e-2)

    print("KERNEL_OK")
</pallas_src>

<mosaic_0001>
module attributes {stable_mosaic.version = 11 : i64} {
  func.func @_ae_kernel(%arg0: i32, %arg1: memref<256x256xf32, #tpu.memory_space<vmem>>, %arg2: memref<256x32xf32, #tpu.memory_space<vmem>>, %arg3: memref<1x32xf32, #tpu.memory_space<vmem>>, %arg4: memref<32x16xf32, #tpu.memory_space<vmem>>, %arg5: memref<1x16xf32, #tpu.memory_space<vmem>>, %arg6: memref<16x256xf32, #tpu.memory_space<vmem>>, %arg7: memref<1x256xf32, #tpu.memory_space<vmem>>, %arg8: memref<256x256xf32, #tpu.memory_space<vmem>>) attributes {dimension_semantics = [#tpu.dimension_semantics<parallel>], iteration_bounds = array<i64: 4>, scalar_prefetch = 0 : i64, scratch_operands = 0 : i64, tpu.core_type = #tpu.core_type<tc>, window_params = [{transform_indices = @transform_0, window_bounds = array<i64: 256, 256>}, {pipeline_mode = #tpu.pipeline_mode<synchronous>, transform_indices = @transform_1, window_bounds = array<i64: 256, 32>}, {pipeline_mode = #tpu.pipeline_mode<synchronous>, transform_indices = @transform_2, window_bounds = array<i64: 1, 32>}, {pipeline_mode = #tpu.pipeline_mode<synchronous>, transform_indices = @transform_3, window_bounds = array<i64: 32, 16>}, {pipeline_mode = #tpu.pipeline_mode<synchronous>, transform_indices = @transform_4, window_bounds = array<i64: 1, 16>}, {pipeline_mode = #tpu.pipeline_mode<synchronous>, transform_indices = @transform_5, window_bounds = array<i64: 16, 256>}, {pipeline_mode = #tpu.pipeline_mode<synchronous>, transform_indices = @transform_6, window_bounds = array<i64: 1, 256>}, {transform_indices = @transform_7, window_bounds = array<i64: 256, 256>}]} {
    %c0 = arith.constant 0 : index
    %c0_0 = arith.constant 0 : index
    %0 = vector.load %arg1[%c0, %c0_0] : memref<256x256xf32, #tpu.memory_space<vmem>>, vector<256x256xf32>
    %c0_1 = arith.constant 0 : index
    %c0_2 = arith.constant 0 : index
    %1 = vector.load %arg2[%c0_1, %c0_2] : memref<256x32xf32, #tpu.memory_space<vmem>>, vector<256x32xf32>
    %cst = arith.constant dense<0.000000e+00> : vector<256x32xf32>
    %2 = tpu.matmul %0, %1, %cst {dimension_numbers = #tpu.dot_dimension_numbers<[1], [0], [0], [1], [0, 0, 1, 1], [], []>} : vector<256x256xf32>, vector<256x32xf32>, vector<256x32xf32> -> vector<256x32xf32>
    %c0_3 = arith.constant 0 : index
    %c0_4 = arith.constant 0 : index
    %3 = vector.load %arg3[%c0_3, %c0_4] : memref<1x32xf32, #tpu.memory_space<vmem>>, vector<1x32xf32>
    %4 = vector.broadcast %3 : vector<1x32xf32> to vector<256x32xf32>
    %5 = arith.addf %2, %4 : vector<256x32xf32>
    %cst_5 = arith.constant 0.000000e+00 : f32
    %6 = vector.broadcast %cst_5 : f32 to vector<256x32xf32>
    %7 = arith.maximumf %5, %6 : vector<256x32xf32>
    %c0_6 = arith.constant 0 : index
    %c0_7 = arith.constant 0 : index
    %8 = vector.load %arg4[%c0_6, %c0_7] : memref<32x16xf32, #tpu.memory_space<vmem>>, vector<32x16xf32>
    %cst_8 = arith.constant dense<0.000000e+00> : vector<256x16xf32>
    %9 = tpu.matmul %7, %8, %cst_8 {dimension_numbers = #tpu.dot_dimension_numbers<[1], [0], [0], [1], [0, 0, 1, 1], [], []>} : vector<256x32xf32>, vector<32x16xf32>, vector<256x16xf32> -> vector<256x16xf32>
    %c0_9 = arith.constant 0 : index
    %c0_10 = arith.constant 0 : index
    %10 = vector.load %arg5[%c0_9, %c0_10] : memref<1x16xf32, #tpu.memory_space<vmem>>, vector<1x16xf32>
    %11 = vector.broadcast %10 : vector<1x16xf32> to vector<256x16xf32>
    %12 = arith.addf %9, %11 : vector<256x16xf32>
    %cst_11 = arith.constant 0.000000e+00 : f32
    %13 = vector.broadcast %cst_11 : f32 to vector<256x16xf32>
    %14 = arith.maximumf %12, %13 : vector<256x16xf32>
    %c0_12 = arith.constant 0 : index
    %c0_13 = arith.constant 0 : index
    %15 = vector.load %arg6[%c0_12, %c0_13] : memref<16x256xf32, #tpu.memory_space<vmem>>, vector<16x256xf32>
    %cst_14 = arith.constant dense<0.000000e+00> : vector<256x256xf32>
    %16 = tpu.matmul %14, %15, %cst_14 {dimension_numbers = #tpu.dot_dimension_numbers<[1], [0], [0], [1], [0, 0, 1, 1], [], []>} : vector<256x16xf32>, vector<16x256xf32>, vector<256x256xf32> -> vector<256x256xf32>
    %c0_15 = arith.constant 0 : index
    %c0_16 = arith.constant 0 : index
    %17 = vector.load %arg7[%c0_15, %c0_16] : memref<1x256xf32, #tpu.memory_space<vmem>>, vector<1x256xf32>
    %18 = vector.broadcast %17 : vector<1x256xf32> to vector<256x256xf32>
    %19 = arith.addf %16, %18 : vector<256x256xf32>
    %20 = arith.negf %19 : vector<256x256xf32>
    %21 = math.exp %20 : vector<256x256xf32>
    %cst_17 = arith.constant 1.000000e+00 : f32
    %22 = vector.broadcast %cst_17 : f32 to vector<256x256xf32>
    %23 = arith.addf %22, %21 : vector<256x256xf32>
    %24 = arith.divf %22, %23 : vector<256x256xf32>
    %c0_18 = arith.constant 0 : index
    %c0_19 = arith.constant 0 : index
    %25 = vector.load %arg8[%c0_18, %c0_19] : memref<256x256xf32, #tpu.memory_space<vmem>>, vector<256x256xf32>
    tpu.vector_store %arg8[%c0_18, %c0_19], %24 {strides = array<i32>} : memref<256x256xf32, #tpu.memory_space<vmem>>, vector<256x256xf32>,
    return
  }
  func.func @transform_0(%arg0: i32) -> (i32, i32) {
    %c0_i32 = arith.constant 0 : i32
    %c0_i32_0 = arith.constant 0 : i32
    return %arg0, %c0_i32 : i32, i32
  }
  func.func @transform_1(%arg0: i32) -> (i32, i32) {
    %c0_i32 = arith.constant 0 : i32
    %c0_i32_0 = arith.constant 0 : i32
    %c0_i32_1 = arith.constant 0 : i32
    return %c0_i32, %c0_i32_0 : i32, i32
  }
  func.func @transform_2(%arg0: i32) -> (i32, i32) {
    %c0_i32 = arith.constant 0 : i32
    %c0_i32_0 = arith.constant 0 : i32
    %c0_i32_1 = arith.constant 0 : i32
    return %c0_i32, %c0_i32_0 : i32, i32
  }
  func.func @transform_3(%arg0: i32) -> (i32, i32) {
    %c0_i32 = arith.constant 0 : i32
    %c0_i32_0 = arith.constant 0 : i32
    %c0_i32_1 = arith.constant 0 : i32
    return %c0_i32, %c0_i32_0 : i32, i32
  }
  func.func @transform_4(%arg0: i32) -> (i32, i32) {
    %c0_i32 = arith.constant 0 : i32
    %c0_i32_0 = arith.constant 0 : i32
    %c0_i32_1 = arith.constant 0 : i32
    return %c0_i32, %c0_i32_0 : i32, i32
  }
  func.func @transform_5(%arg0: i32) -> (i32, i32) {
    %c0_i32 = arith.constant 0 : i32
    %c0_i32_0 = arith.constant 0 : i32
    %c0_i32_1 = arith.constant 0 : i32
    return %c0_i32, %c0_i32_0 : i32, i32
  }
  func.func @transform_6(%arg0: i32) -> (i32, i32) {
    %c0_i32 = arith.constant 0 : i32
    %c0_i32_0 = arith.constant 0 : i32
    %c0_i32_1 = arith.constant 0 : i32
    return %c0_i32, %c0_i32_0 : i32, i32
  }
  func.func @transform_7(%arg0: i32) -> (i32, i32) {
    %c0_i32 = arith.constant 0 : i32
    %c0_i32_0 = arith.constant 0 : i32
    return %arg0, %c0_i32 : i32, i32
  }
}

</mosaic_0001>

<llo_original>
// kernel: tpu_custom_call.1
$region0: #{tpu_custom_call.1}
  #allocation0 [shape = 'u32[]', space=smem, size = 0x4, offset = 0x4, fixed_abs, tag = 'smem constant byte address 0x4 - core index']
  #allocation1 [shape = 'u32[72,128]{1,0:T(1,128)}', space=vmem, size = 0x9000, scoped, tag = 'internal scratch']
  %s0 = inlined_call_operand.hbm [shape: f32[1024,256], index: 0, kind: input, shape index: {}]
  %s1 = inlined_call_operand.vmem [shape: f32[256,32], index: 1, kind: input, shape index: {}]
  %s2 = inlined_call_operand.vmem [shape: f32[1,32], index: 2, kind: input, shape index: {}]
  %s3 = inlined_call_operand.vmem [shape: f32[32,16], index: 3, kind: input, shape index: {}]
  %s4 = inlined_call_operand.vmem [shape: f32[1,16], index: 4, kind: input, shape index: {}]
  %s5 = inlined_call_operand.vmem [shape: f32[16,256], index: 5, kind: input, shape index: {}]
  %s6 = inlined_call_operand.vmem [shape: f32[1,256], index: 6, kind: input, shape index: {}]
  %s7 = inlined_call_operand.hbm [shape: f32[1024,256], index: 7, kind: output, shape index: {}]
  %s8 = sld [smem:[#allocation0]]
  $region65: #{tpu_custom_call.1} parent=0
    _
  %s10 = ssub.s32 1, %s8
  %s11 = scalar_select 0, %s10, %s8
  $region1: #{tpu_custom_call.1} parent=0
    #allocation2 [shape = 'u8[524288]{0}', space=vmem, size = 0x80000, scoped, tag = 'input window, operand 0']
    #allocation3 [shape = 's32[2]{0}', space=sflag, size = 0x8, scoped, tag = 'scoped memory for tpu_custom_call.1']
    #allocation4 [shape = 's32[2]{0}', space=sflag, size = 0x8, scoped, tag = 'scoped memory for tpu_custom_call.1']
    #allocation5 [shape = 'u8[524288]{0}', space=vmem, size = 0x80000, scoped, tag = 'output window, operand 0']
    %12 = vsyncpa [#allocation3], 0
    %s13 = scalar_lea.sflag [#allocation3], 1
    %14 = vsyncpa %s13, 0
    %15 = vsyncpa [#allocation4], 0
    %s16 = scalar_lea.sflag [#allocation4], 1
    %17 = vsyncpa %s16, 0
    loop: start=0, step=1, limit=6
    $region2: #{tpu_custom_call.1} parent=1 // loop_pre_header
      _
    $region3: #{tpu_custom_call.1} parent=1 // loop_header
      %s19 = sphi 0, %s23
      %p20 = scmp.ge.s32.totalorder %s19, 6
      %s29 = sphi 0, %s31
      %s32 = sphi 0, %s29
      %s33 = sphi 0, %s32
      %s49 = sphi 0, %s33
      %s53 = sphi 0, %s53
      %s55 = sphi 0, %s53
      %s56 = sphi 0, %s55
      %s70 = sphi 0, %s56
      %s74 = sphi 0, %s74
      %s76 = sphi 0, %s74
      %s77 = sphi 0, %s76
      %s91 = sphi 0, %s77
      %s95 = sphi 0, %s95
      %s97 = sphi 0, %s95
      %s98 = sphi 0, %s97
      %s112 = sphi 0, %s98
      %s116 = sphi 0, %s116
      %s118 = sphi 0, %s116
      %s119 = sphi 0, %s118
      %s133 = sphi 0, %s119
      %s137 = sphi 0, %s137
      %s139 = sphi 0, %s137
      %s140 = sphi 0, %s139
      %s154 = sphi 0, %s140
      %s158 = sphi 0, %s158
      %s160 = sphi 0, %s158
      %s161 = sphi 0, %s160
      %s175 = sphi 0, %s161
      %s181 = sphi 0, %s183
      %s184 = sphi 0, %s181
      %s185 = sphi 0, %s184
      %s201 = sphi 0, %s185
    $region4: #{tpu_custom_call.1} parent=1 // loop_header_branch
      %22 = sbr.rel (%p20) target = $region8
    $region5: #{tpu_custom_call.1} parent=1 // loop_body
      %s24 = ssub.s32 %s19, 1
      %s25 = ssub.s32 %s19, 2
      %s26 = sadd.s32 %s19, 1
      %s27 = ssub.s32 %s19, %s26
      %p28 = scmp.eq.s32.totalorder %s27, 0
      %s30 = sadd.s32 %s29, 1
      %s31 = scalar_select %p28, %s29, %s30
      %p34 = pneg %p28
      %p35 = scmp.eq.s32.totalorder %s19, 3
      %p36 = por %p34, %p35
      %p37 = scmp.ne.s32.totalorder %s29, %s32
      %p38 = scmp.eq.s32.totalorder %s19, 0
      %p39 = por %p37, %p38
      %p40 = scmp.ne.s32.totalorder %s29, %s32
      %p41 = scmp.eq.s32.totalorder %s24, 3
      %p42 = por %p40, %p41
      %p43 = scmp.ne.s32.totalorder %s32, %s33
      %p44 = scmp.eq.s32.totalorder %s24, 0
      %p45 = por %p43, %p44
      %p46 = scmp.ne.s32.totalorder %s32, %s33
      %p47 = scmp.eq.s32.totalorder %s25, 3
      %p48 = por %p46, %p47
      %p50 = scmp.ne.s32.totalorder %s33, %s49
      %p51 = scmp.eq.s32.totalorder %s25, 0
      %p52 = por %p50, %p51
      %s54 = sadd.s32 %s53, 1
      %p57 = scmp.eq.s32.totalorder %s19, 3
      %p58 = scmp.ne.s32.totalorder %s53, %s55
      %p59 = scmp.eq.s32.totalorder %s19, 0
      %p60 = por %p58, %p59
      %p61 = scmp.ne.s32.totalorder %s53, %s55
      %p62 = scmp.eq.s32.totalorder %s24, 3
      %p63 = por %p61, %p62
      %p64 = scmp.ne.s32.totalorder %s55, %s56
      %p65 = scmp.eq.s32.totalorder %s24, 0
      %p66 = por %p64, %p65
      %p67 = scmp.ne.s32.totalorder %s55, %s56
      %p68 = scmp.eq.s32.totalorder %s25, 3
      %p69 = por %p67, %p68
      %p71 = scmp.ne.s32.totalorder %s56, %s70
      %p72 = scmp.eq.s32.totalorder %s25, 0
      %p73 = por %p71, %p72
      %s75 = sadd.s32 %s74, 1
      %p78 = scmp.eq.s32.totalorder %s19, 3
      %p79 = scmp.ne.s32.totalorder %s74, %s76
      %p80 = scmp.eq.s32.totalorder %s19, 0
      %p81 = por %p79, %p80
      %p82 = scmp.ne.s32.totalorder %s74, %s76
      %p83 = scmp.eq.s32.totalorder %s24, 3
      %p84 = por %p82, %p83
      %p85 = scmp.ne.s32.totalorder %s76, %s77
      %p86 = scmp.eq.s32.totalorder %s24, 0
      %p87 = por %p85, %p86
      %p88 = scmp.ne.s32.totalorder %s76, %s77
      %p89 = scmp.eq.s32.totalorder %s25, 3
      %p90 = por %p88, %p89
      %p92 = scmp.ne.s32.totalorder %s77, %s91
      %p93 = scmp.eq.s32.totalorder %s25, 0
      %p94 = por %p92, %p93
      %s96 = sadd.s32 %s95, 1
      %p99 = scmp.eq.s32.totalorder %s19, 3
      %p100 = scmp.ne.s32.totalorder %s95, %s97
      %p101 = scmp.eq.s32.totalorder %s19, 0
      %p102 = por %p100, %p101
      %p103 = scmp.ne.s32.totalorder %s95, %s97
      %p104 = scmp.eq.s32.totalorder %s24, 3
      %p105 = por %p103, %p104
      %p106 = scmp.ne.s32.totalorder %s97, %s98
      %p107 = scmp.eq.s32.totalorder %s24, 0
      %p108 = por %p106, %p107
      %p109 = scmp.ne.s32.totalorder %s97, %s98
      %p110 = scmp.eq.s32.totalorder %s25, 3
      %p111 = por %p109, %p110
      %p113 = scmp.ne.s32.totalorder %s98, %s112
      %p114 = scmp.eq.s32.totalorder %s25, 0
      %p115 = por %p113, %p114
      %s117 = sadd.s32 %s116, 1
      %p120 = scmp.eq.s32.totalorder %s19, 3
      %p121 = scmp.ne.s32.totalorder %s116, %s118
      %p122 = scmp.eq.s32.totalorder %s19, 0
      %p123 = por %p121, %p122
      %p124 = scmp.ne.s32.totalorder %s116, %s118
      %p125 = scmp.eq.s32.totalorder %s24, 3
      %p126 = por %p124, %p125
      %p127 = scmp.ne.s32.totalorder %s118, %s119
      %p128 = scmp.eq.s32.totalorder %s24, 0
      %p129 = por %p127, %p128
      %p130 = scmp.ne.s32.totalorder %s118, %s119
      %p131 = scmp.eq.s32.totalorder %s25, 3
      %p132 = por %p130, %p131
      %p134 = scmp.ne.s32.totalorder %s119, %s133
      %p135 = scmp.eq.s32.totalorder %s25, 0
      %p136 = por %p134, %p135
      %s138 = sadd.s32 %s137, 1
      %p141 = scmp.eq.s32.totalorder %s19, 3
      %p142 = scmp.ne.s32.totalorder %s137, %s139
      %p143 = scmp.eq.s32.totalorder %s19, 0
      %p144 = por %p142, %p143
      %p145 = scmp.ne.s32.totalorder %s137, %s139
      %p146 = scmp.eq.s32.totalorder %s24, 3
      %p147 = por %p145, %p146
      %p148 = scmp.ne.s32.totalorder %s139, %s140
      %p149 = scmp.eq.s32.totalorder %s24, 0
      %p150 = por %p148, %p149
      %p151 = scmp.ne.s32.totalorder %s139, %s140
      %p152 = scmp.eq.s32.totalorder %s25, 3
      %p153 = por %p151, %p152
      %p155 = scmp.ne.s32.totalorder %s140, %s154
      %p156 = scmp.eq.s32.totalorder %s25, 0
      %p157 = por %p155, %p156
      %s159 = sadd.s32 %s158, 1
      %p162 = scmp.eq.s32.totalorder %s19, 3
      %p163 = scmp.ne.s32.totalorder %s158, %s160
      %p164 = scmp.eq.s32.totalorder %s19, 0
      %p165 = por %p163, %p164
      %p166 = scmp.ne.s32.totalorder %s158, %s160
      %p167 = scmp.eq.s32.totalorder %s24, 3
      %p168 = por %p166, %p167
      %p169 = scmp.ne.s32.totalorder %s160, %s161
      %p170 = scmp.eq.s32.totalorder %s24, 0
      %p171 = por %p169, %p170
      %p172 = scmp.ne.s32.totalorder %s160, %s161
      %p173 = scmp.eq.s32.totalorder %s25, 3
      %p174 = por %p172, %p173
      %p176 = scmp.ne.s32.totalorder %s161, %s175
      %p177 = scmp.eq.s32.totalorder %s25, 0
      %p178 = por %p176, %p177
      %s179 = ssub.s32 %s19, %s26
      %p180 = scmp.eq.s32.totalorder %s179, 0
      %s182 = sadd.s32 %s181, 1
      %s183 = scalar_select %p180, %s181, %s182
      %p186 = pneg %p180
      %p187 = scmp.eq.s32.totalorder %s19, 3
      %p188 = por %p186, %p187
      %p189 = scmp.ne.s32.totalorder %s181, %s184
      %p190 = scmp.eq.s32.totalorder %s19, 0
      %p191 = por %p189, %p190
      %p192 = scmp.ne.s32.totalorder %s181, %s184
      %p193 = scmp.eq.s32.totalorder %s24, 3
      %p194 = por %p192, %p193
      %p195 = scmp.ne.s32.totalorder %s184, %s185
      %p196 = scmp.eq.s32.totalorder %s24, 0
      %p197 = por %p195, %p196
      %p198 = scmp.ne.s32.totalorder %s184, %s185
      %p199 = scmp.eq.s32.totalorder %s25, 3
      %p200 = por %p198, %p199
      %p202 = scmp.ne.s32.totalorder %s185, %s201
      %p203 = scmp.eq.s32.totalorder %s25, 0
      %p204 = por %p202, %p203
      %p205 = scmp.le.s32.totalorder 1, %s19
      %p206 = scmp.lt.s32.totalorder %s19, 5
      %p207 = pnand %p205, %p206
      %p208 = pneg %p207
      // Predicated region
      $region9: #{tpu_custom_call.1} parent=5 // pred_check
        _
      $region10: #{tpu_custom_call.1} parent=5 // pred_check_branch
        %210 = sbr.rel (%p207) target = $region12
      $region11: #{tpu_custom_call.1} parent=5 // pred_region
        %s211 = ssub.s32 %s19, 1
        // Predicated region
        $region13: #{tpu_custom_call.1} parent=11 // pred_check
          %p212 = pneg %p66
        $region14: #{tpu_custom_call.1} parent=11 // pred_check_branch
          %214 = sbr.rel (%p212) target = $region16
        $region15: #{tpu_custom_call.1} parent=11 // pred_region
          _
        $region16: #{tpu_custom_call.1} parent=11 // pred_fallthru
          _
        // Predicated region
        $region17: #{tpu_custom_call.1} parent=11 // pred_check
          %p215 = pneg %p87
        $region18: #{tpu_custom_call.1} parent=11 // pred_check_branch
          %217 = sbr.rel (%p215) target = $region20
        $region19: #{tpu_custom_call.1} parent=11 // pred_region
          _
        $region20: #{tpu_custom_call.1} parent=11 // pred_fallthru
          _
        // Predicated region
        $region21: #{tpu_custom_call.1} parent=11 // pred_check
          %p218 = pneg %p108
        $region22: #{tpu_custom_call.1} parent=11 // pred_check_branch
          %220 = sbr.rel (%p218) target = $region24
        $region23: #{tpu_custom_call.1} parent=11 // pred_region
          _
        $region24: #{tpu_custom_call.1} parent=11 // pred_fallthru
          _
        // Predicated region
        $region25: #{tpu_custom_call.1} parent=11 // pred_check
          %p221 = pneg %p129
        $region26: #{tpu_custom_call.1} parent=11 // pred_check_branch
          %223 = sbr.rel (%p221) target = $region28
        $region27: #{tpu_custom_call.1} parent=11 // pred_region
          _
        $region28: #{tpu_custom_call.1} parent=11 // pred_fallthru
          _
        // Predicated region
        $region29: #{tpu_custom_call.1} parent=11 // pred_check
          %p224 = pneg %p150
        $region30: #{tpu_custom_call.1} parent=11 // pred_check_branch
          %226 = sbr.rel (%p224) target = $region32
        $region31: #{tpu_custom_call.1} parent=11 // pred_region
          _
        $region32: #{tpu_custom_call.1} parent=11 // pred_fallthru
          _
        // Predicated region
        $region33: #{tpu_custom_call.1} parent=11 // pred_check
          %p227 = pneg %p171
        $region34: #{tpu_custom_call.1} parent=11 // pred_check_branch
          %229 = sbr.rel (%p227) target = $region36
        $region35: #{tpu_custom_call.1} parent=11 // pred_region
          _
        $region36: #{tpu_custom_call.1} parent=11 // pred_fallthru
          _
      $region12: #{tpu_custom_call.1} parent=5 // pred_fallthru
        _
      %p230 = scmp.lt.s32.totalorder %s19, 4
      // Predicated region
      $region37: #{tpu_custom_call.1} parent=5 // pred_check
        %p231 = pneg %p230
      $region38: #{tpu_custom_call.1} parent=5 // pred_check_branch
        %233 = sbr.rel (%p231) target = $region40
      $region39: #{tpu_custom_call.1} parent=5 // pred_region
        // Predicated region
        $region41: #{tpu_custom_call.1} parent=39 // pred_check
          %p234 = pneg %p39
        $region42: #{tpu_custom_call.1} parent=39 // pred_check_branch
          %236 = sbr.rel (%p234) target = $region44
        $region43: #{tpu_custom_call.1} parent=39 // pred_region
          %s237 = sand.u32 %s29, 1
          %s238 = scalar_lea.sflag [#allocation3], %s237
          %s239 = sand.u32 %s29, 1
          %s240 = smul.addr %s239, 512
          %s241 = scalar_lea.vmem [#allocation2], %s240
          %s242 = smul.u32 32, %s19
          %244 = vsyncadd %s238, 0
          %s245 = smul.addr %s242, 2
          %s246 = smul.addr %s245, 8
          %s247 = scalar_lea.hbm %s0, %s246
          %s248 = sshll.u32 %s247, 4
          %s249 = int_to_ptr.hbm [resolvable:$true] %s248
          %s250 = sshll.u32 %s241, 4
          %s251 = int_to_ptr.vmem [resolvable:$true] %s250
          %256 = dma.hbm_to_vmem [thread:$0]  %s249, 8192, %s251, %s238, 256, 256, 16
        $region44: #{tpu_custom_call.1} parent=39 // pred_fallthru
          _
      $region40: #{tpu_custom_call.1} parent=5 // pred_fallthru
        _
      %p257 = scmp.le.s32.totalorder 1, %s19
      %p258 = scmp.lt.s32.totalorder %s19, 5
      %p259 = pnand %p257, %p258
      %p260 = pneg %p259
      // Predicated region
      $region45: #{tpu_custom_call.1} parent=5 // pred_check
        _
      $region46: #{tpu_custom_call.1} parent=5 // pred_check_branch
        %262 = sbr.rel (%p259) target = $region48
      $region47: #{tpu_custom_call.1} parent=5 // pred_region
        %s263 = ssub.s32 %s19, 1
        %s264 = sand.u32 %s32, 1
        %s265 = scalar_lea.sflag [#allocation3], %s264
        %s266 = sand.u32 %s32, 1
        %s267 = smul.addr %s266, 512
        %s268 = scalar_lea.vmem [#allocation2], %s267
        // Predicated region
        $region49: #{tpu_custom_call.1} parent=47 // pred_check
          %p269 = pneg %p45
        $region50: #{tpu_custom_call.1} parent=47 // pred_check_branch
          %271 = sbr.rel (%p269) target = $region52
        $region51: #{tpu_custom_call.1} parent=47 // pred_region
          %273 = dma.done %s265, 8192
        $region52: #{tpu_custom_call.1} parent=47 // pred_fallthru
          _
        %s274 = sand.u32 %s32, 1
        %s275 = scalar_lea.sflag [#allocation3], %s274
        %s276 = sand.u32 %s32, 1
        %s277 = smul.addr %s276, 512
        %s278 = scalar_lea.vmem [#allocation2], %s277
        %p279 = pneg %p45
        %p280 = pneg %p42
        %p281 = pneg %p66
        %p282 = pneg %p63
        %p283 = pneg %p87
        %p284 = pneg %p84
        %p285 = pneg %p108
        %p286 = pneg %p105
        %p287 = pneg %p129
        %p288 = pneg %p126
        %p289 = pneg %p150
        %p290 = pneg %p147
        %p291 = pneg %p171
        %p292 = pneg %p168
        %p293 = pneg %p197
        %p294 = pneg %p194
        %s295 = sand.u32 %s184, 1
        %s296 = scalar_lea.sflag [#allocation4], %s295
        %s297 = sand.u32 %s184, 1
        %s298 = smul.addr %s297, 512
        %s299 = scalar_lea.vmem [#allocation5], %s298
        %s300 = smul.u32 32, %s24
        %s301 = smul.u32 32, %s24
        %v302 = vld [vmem:[%s268] sm:$0xff]
        %v303 = vld [vmem:[%s268 + $0x8] sm:$0xff]
        %v304 = vld [vmem:[%s268 + $0x10] sm:$0xff]
        %v305 = vld [vmem:[%s268 + $0x18] sm:$0xff]
        %v306 = vld [vmem:[%s268 + $0x20] sm:$0xff]
        %v307 = vld [vmem:[%s268 + $0x28] sm:$0xff]
        %v308 = vld [vmem:[%s268 + $0x30] sm:$0xff]
        %v309 = vld [vmem:[%s268 + $0x38] sm:$0xff]
        %v310 = vld [vmem:[%s268 + $0x40] sm:$0xff]
        %v311 = vld [vmem:[%s268 + $0x48] sm:$0xff]
        %v312 = vld [vmem:[%s268 + $0x50] sm:$0xff]
        %v313 = vld [vmem:[%s268 + $0x58] sm:$0xff]
        %v314 = vld [vmem:[%s268 + $0x60] sm:$0xff]
        %v315 = vld [vmem:[%s268 + $0x68] sm:$0xff]
        %v316 = vld [vmem:[%s268 + $0x70] sm:$0xff]
        %v317 = vld [vmem:[%s268 + $0x78] sm:$0xff]
        %v318 = vld [vmem:[%s268 + $0x80] sm:$0xff]
        %v319 = vld [vmem:[%s268 + $0x88] sm:$0xff]
        %v320 = vld [vmem:[%s268 + $0x90] sm:$0xff]
        %v321 = vld [vmem:[%s268 + $0x98] sm:$0xff]
        %v322 = vld [vmem:[%s268 + $0xa0] sm:$0xff]
        %v323 = vld [vmem:[%s268 + $0xa8] sm:$0xff]
        %v324 = vld [vmem:[%s268 + $0xb0] sm:$0xff]
        %v325 = vld [vmem:[%s268 + $0xb8] sm:$0xff]
        %v326 = vld [vmem:[%s268 + $0xc0] sm:$0xff]
        %v327 = vld [vmem:[%s268 + $0xc8] sm:$0xff]
        %v328 = vld [vmem:[%s268 + $0xd0] sm:$0xff]
        %v329 = vld [vmem:[%s268 + $0xd8] sm:$0xff]
        %v330 = vld [vmem:[%s268 + $0xe0] sm:$0xff]
        %v331 = vld [vmem:[%s268 + $0xe8] sm:$0xff]
        %v332 = vld [vmem:[%s268 + $0xf0] sm:$0xff]
        %v333 = vld [vmem:[%s268 + $0xf8] sm:$0xff]
        %v334 = vld [vmem:[%s268 + $0x100] sm:$0xff]
        %v335 = vld [vmem:[%s268 + $0x108] sm:$0xff]
        %v336 = vld [vmem:[%s268 + $0x110] sm:$0xff]
        %v337 = vld [vmem:[%s268 + $0x118] sm:$0xff]
        %v338 = vld [vmem:[%s268 + $0x120] sm:$0xff]
        %v339 = vld [vmem:[%s268 + $0x128] sm:$0xff]
        %v340 = vld [vmem:[%s268 + $0x130] sm:$0xff]
        %v341 = vld [vmem:[%s268 + $0x138] sm:$0xff]
        %v342 = vld [vmem:[%s268 + $0x140] sm:$0xff]
        %v343 = vld [vmem:[%s268 + $0x148] sm:$0xff]
        %v344 = vld [vmem:[%s268 + $0x150] sm:$0xff]
        %v345 = vld [vmem:[%s268 + $0x158] sm:$0xff]
        %v346 = vld [vmem:[%s268 + $0x160] sm:$0xff]
        %v347 = vld [vmem:[%s268 + $0x168] sm:$0xff]
        %v348 = vld [vmem:[%s268 + $0x170] sm:$0xff]
        %v349 = vld [vmem:[%s268 + $0x178] sm:$0xff]
        %v350 = vld [vmem:[%s268 + $0x180] sm:$0xff]
        %v351 = vld [vmem:[%s268 + $0x188] sm:$0xff]
        %v352 = vld [vmem:[%s268 + $0x190] sm:$0xff]
        %v353 = vld [vmem:[%s268 + $0x198] sm:$0xff]
        %v354 = vld [vmem:[%s268 + $0x1a0] sm:$0xff]
        %v355 = vld [vmem:[%s268 + $0x1a8] sm:$0xff]
        %v356 = vld [vmem:[%s268 + $0x1b0] sm:$0xff]
        %v357 = vld [vmem:[%s268 + $0x1b8] sm:$0xff]
        %v358 = vld [vmem:[%s268 + $0x1c0] sm:$0xff]
        %v359 = vld [vmem:[%s268 + $0x1c8] sm:$0xff]
        %v360 = vld [vmem:[%s268 + $0x1d0] sm:$0xff]
        %v361 = vld [vmem:[%s268 + $0x1d8] sm:$0xff]
        %v362 = vld [vmem:[%s268 + $0x1e0] sm:$0xff]
        %v363 = vld [vmem:[%s268 + $0x1e8] sm:$0xff]
        %v364 = vld [vmem:[%s268 + $0x1f0] sm:$0xff]
        %v365 = vld [vmem:[%s268 + $0x1f8] sm:$0xff]
        %v366 = vld [vmem:[%s1] sm:$0xff]
        %v367 = vld [vmem:[%s1 + $0x8] sm:$0xff]
        %v368 = vld [vmem:[%s1 + $0x10] sm:$0xff]
        %v369 = vld [vmem:[%s1 + $0x18] sm:$0xff]
        %v370 = vld [vmem:[%s1 + $0x20] sm:$0xff]
        %v371 = vld [vmem:[%s1 + $0x28] sm:$0xff]
        %v372 = vld [vmem:[%s1 + $0x30] sm:$0xff]
        %v373 = vld [vmem:[%s1 + $0x38] sm:$0xff]
        %v374 = vld [vmem:[%s1 + $0x40] sm:$0xff]
        %v375 = vld [vmem:[%s1 + $0x48] sm:$0xff]
        %v376 = vld [vmem:[%s1 + $0x50] sm:$0xff]
        %v377 = vld [vmem:[%s1 + $0x58] sm:$0xff]
        %v378 = vld [vmem:[%s1 + $0x60] sm:$0xff]
        %v379 = vld [vmem:[%s1 + $0x68] sm:$0xff]
        %v380 = vld [vmem:[%s1 + $0x70] sm:$0xff]
        %v381 = vld [vmem:[%s1 + $0x78] sm:$0xff]
        %v382 = vld [vmem:[%s1 + $0x80] sm:$0xff]
        %v383 = vld [vmem:[%s1 + $0x88] sm:$0xff]
        %v384 = vld [vmem:[%s1 + $0x90] sm:$0xff]
        %v385 = vld [vmem:[%s1 + $0x98] sm:$0xff]
        %v386 = vld [vmem:[%s1 + $0xa0] sm:$0xff]
        %v387 = vld [vmem:[%s1 + $0xa8] sm:$0xff]
        %v388 = vld [vmem:[%s1 + $0xb0] sm:$0xff]
        %v389 = vld [vmem:[%s1 + $0xb8] sm:$0xff]
        %v390 = vld [vmem:[%s1 + $0xc0] sm:$0xff]
        %v391 = vld [vmem:[%s1 + $0xc8] sm:$0xff]
        %v392 = vld [vmem:[%s1 + $0xd0] sm:$0xff]
        %v393 = vld [vmem:[%s1 + $0xd8] sm:$0xff]
        %v394 = vld [vmem:[%s1 + $0xe0] sm:$0xff]
        %v395 = vld [vmem:[%s1 + $0xe8] sm:$0xff]
        %v396 = vld [vmem:[%s1 + $0xf0] sm:$0xff]
        %v397 = vld [vmem:[%s1 + $0xf8] sm:$0xff]
        %v398 = vld [vmem:[%s2] sm:$0x1]
        %v400 = vperm.slane %v398, 0
        %402 = vmatpush.msra.mxu0 %v381
        %403 = vmatpush.msra.mxu0 %v380
        %404 = vmatpush.msra.mxu0 %v379
        %405 = vmatpush.msra.mxu0 %v378
        %406 = vmatpush.msra.mxu0 %v377
        %407 = vmatpush.msra.mxu0 %v376
        %408 = vmatpush.msra.mxu0 %v375
        %409 = vmatpush.msra.mxu0 %v374
        %410 = vmatpush.msra.mxu0 %v373
        %411 = vmatpush.msra.mxu0 %v372
        %412 = vmatpush.msra.mxu0 %v371
        %413 = vmatpush.msra.mxu0 %v370
        %414 = vmatpush.msra.mxu0 %v369
        %415 = vmatpush.msra.mxu0 %v368
        %416 = vmatpush.msra.mxu0 %v367
        %417 = vmatpush.msra.mxu0 %v366
        %418 = vmatmul.f32.gmra.mxu0 %v302
        %v419 = vpop.f32.mrf.mxu0
        %v420 = vadd.f32 %v400, %v419
        %421 = vmatmul.f32.gmra.mxu0 %v304
        %v422 = vpop.f32.mrf.mxu0
        %v423 = vadd.f32 %v400, %v422
        %424 = vmatmul.f32.gmra.mxu0 %v306
        %v425 = vpop.f32.mrf.mxu0
        %v426 = vadd.f32 %v400, %v425
        %427 = vmatmul.f32.gmra.mxu0 %v308
        %v428 = vpop.f32.mrf.mxu0
        %v429 = vadd.f32 %v400, %v428
        %430 = vmatmul.f32.gmra.mxu0 %v310
        %v431 = vpop.f32.mrf.mxu0
        %v432 = vadd.f32 %v400, %v431
        %433 = vmatmul.f32.gmra.mxu0 %v312
        %v434 = vpop.f32.mrf.mxu0
        %v435 = vadd.f32 %v400, %v434
        %436 = vmatmul.f32.gmra.mxu0 %v314
        %v437 = vpop.f32.mrf.mxu0
        %v438 = vadd.f32 %v400, %v437
        %439 = vmatmul.f32.gmra.mxu0 %v316
        %v440 = vpop.f32.mrf.mxu0
        %v441 = vadd.f32 %v400, %v440
        %442 = vmatmul.f32.gmra.mxu0 %v318
        %v443 = vpop.f32.mrf.mxu0
        %v444 = vadd.f32 %v400, %v443
        %445 = vmatmul.f32.gmra.mxu0 %v320
        %v446 = vpop.f32.mrf.mxu0
        %v447 = vadd.f32 %v400, %v446
        %448 = vmatmul.f32.gmra.mxu0 %v322
        %v449 = vpop.f32.mrf.mxu0
        %v450 = vadd.f32 %v400, %v449
        %451 = vmatmul.f32.gmra.mxu0 %v324
        %v452 = vpop.f32.mrf.mxu0
        %v453 = vadd.f32 %v400, %v452
        %454 = vmatmul.f32.gmra.mxu0 %v326
        %v455 = vpop.f32.mrf.mxu0
        %v456 = vadd.f32 %v400, %v455
        %457 = vmatmul.f32.gmra.mxu0 %v328
        %v458 = vpop.f32.mrf.mxu0
        %v459 = vadd.f32 %v400, %v458
        %460 = vmatmul.f32.gmra.mxu0 %v330
        %v461 = vpop.f32.mrf.mxu0
        %v462 = vadd.f32 %v400, %v461
        %463 = vmatmul.f32.gmra.mxu0 %v332
        %v464 = vpop.f32.mrf.mxu0
        %v465 = vadd.f32 %v400, %v464
        %466 = vmatmul.f32.gmra.mxu0 %v334
        %v467 = vpop.f32.mrf.mxu0
        %v468 = vadd.f32 %v400, %v467
        %469 = vmatmul.f32.gmra.mxu0 %v336
        %v470 = vpop.f32.mrf.mxu0
        %v471 = vadd.f32 %v400, %v470
        %472 = vmatmul.f32.gmra.mxu0 %v338
        %v473 = vpop.f32.mrf.mxu0
        %v474 = vadd.f32 %v400, %v473
        %475 = vmatmul.f32.gmra.mxu0 %v340
        %v476 = vpop.f32.mrf.mxu0
        %v477 = vadd.f32 %v400, %v476
        %478 = vmatmul.f32.gmra.mxu0 %v342
        %v479 = vpop.f32.mrf.mxu0
        %v480 = vadd.f32 %v400, %v479
        %481 = vmatmul.f32.gmra.mxu0 %v344
        %v482 = vpop.f32.mrf.mxu0
        %v483 = vadd.f32 %v400, %v482
        %484 = vmatmul.f32.gmra.mxu0 %v346
        %v485 = vpop.f32.mrf.mxu0
        %v486 = vadd.f32 %v400, %v485
        %487 = vmatmul.f32.gmra.mxu0 %v348
        %v488 = vpop.f32.mrf.mxu0
        %v489 = vadd.f32 %v400, %v488
        %490 = vmatmul.f32.gmra.mxu0 %v350
        %v491 = vpop.f32.mrf.mxu0
        %v492 = vadd.f32 %v400, %v491
        %493 = vmatmul.f32.gmra.mxu0 %v352
        %v494 = vpop.f32.mrf.mxu0
        %v495 = vadd.f32 %v400, %v494
        %496 = vmatmul.f32.gmra.mxu0 %v354
        %v497 = vpop.f32.mrf.mxu0
        %v498 = vadd.f32 %v400, %v497
        %499 = vmatmul.f32.gmra.mxu0 %v356
        %v500 = vpop.f32.mrf.mxu0
        %v501 = vadd.f32 %v400, %v500
        %502 = vmatmul.f32.gmra.mxu0 %v358
        %v503 = vpop.f32.mrf.mxu0
        %v504 = vadd.f32 %v400, %v503
        %505 = vmatmul.f32.gmra.mxu0 %v360
        %v506 = vpop.f32.mrf.mxu0
        %v507 = vadd.f32 %v400, %v506
        %508 = vmatmul.f32.gmra.mxu0 %v362
        %v509 = vpop.f32.mrf.mxu0
        %v510 = vadd.f32 %v400, %v509
        %511 = vmatmul.f32.gmra.mxu0 %v364
        %v512 = vpop.f32.mrf.mxu0
        %v513 = vadd.f32 %v400, %v512
        %514 = vdwg.mxu0
        %515 = vmatpush.msra.mxu0 %v397
        %516 = vmatpush.msra.mxu0 %v396
        %517 = vmatpush.msra.mxu0 %v395
        %518 = vmatpush.msra.mxu0 %v394
        %519 = vmatpush.msra.mxu0 %v393
        %520 = vmatpush.msra.mxu0 %v392
        %521 = vmatpush.msra.mxu0 %v391
        %522 = vmatpush.msra.mxu0 %v390
        %523 = vmatpush.msra.mxu0 %v389
        %524 = vmatpush.msra.mxu0 %v388
        %525 = vmatpush.msra.mxu0 %v387
        %526 = vmatpush.msra.mxu0 %v386
        %527 = vmatpush.msra.mxu0 %v385
        %528 = vmatpush.msra.mxu0 %v384
        %529 = vmatpush.msra.mxu0 %v383
        %530 = vmatpush.msra.mxu0 %v382
        %531 = vmatmul.f32.gmra.mxu0 %v303
        %v532 = vpop.f32.mrf.mxu0
        %v533 = vadd.f32 %v420, %v532
        %534 = vmatmul.f32.gmra.mxu0 %v305
        %v535 = vpop.f32.mrf.mxu0
        %v536 = vadd.f32 %v423, %v535
        %537 = vmatmul.f32.gmra.mxu0 %v307
        %v538 = vpop.f32.mrf.mxu0
        %v539 = vadd.f32 %v426, %v538
        %540 = vmatmul.f32.gmra.mxu0 %v309
        %v541 = vpop.f32.mrf.mxu0
        %v542 = vadd.f32 %v429, %v541
        %543 = vmatmul.f32.gmra.mxu0 %v311
        %v544 = vpop.f32.mrf.mxu0
        %v545 = vadd.f32 %v432, %v544
        %546 = vmatmul.f32.gmra.mxu0 %v313
        %v547 = vpop.f32.mrf.mxu0
        %v548 = vadd.f32 %v435, %v547
        %549 = vmatmul.f32.gmra.mxu0 %v315
        %v550 = vpop.f32.mrf.mxu0
        %v551 = vadd.f32 %v438, %v550
        %552 = vmatmul.f32.gmra.mxu0 %v317
        %v553 = vpop.f32.mrf.mxu0
        %v554 = vadd.f32 %v441, %v553
        %555 = vmatmul.f32.gmra.mxu0 %v319
        %v556 = vpop.f32.mrf.mxu0
        %v557 = vadd.f32 %v444, %v556
        %558 = vmatmul.f32.gmra.mxu0 %v321
        %v559 = vpop.f32.mrf.mxu0
        %v560 = vadd.f32 %v447, %v559
        %561 = vmatmul.f32.gmra.mxu0 %v323
        %v562 = vpop.f32.mrf.mxu0
        %v563 = vadd.f32 %v450, %v562
        %564 = vmatmul.f32.gmra.mxu0 %v325
        %v565 = vpop.f32.mrf.mxu0
        %v566 = vadd.f32 %v453, %v565
        %567 = vmatmul.f32.gmra.mxu0 %v327
        %v568 = vpop.f32.mrf.mxu0
        %v569 = vadd.f32 %v456, %v568
        %570 = vmatmul.f32.gmra.mxu0 %v329
        %v571 = vpop.f32.mrf.mxu0
        %v572 = vadd.f32 %v459, %v571
        %573 = vmatmul.f32.gmra.mxu0 %v331
        %v574 = vpop.f32.mrf.mxu0
        %v575 = vadd.f32 %v462, %v574
        %576 = vmatmul.f32.gmra.mxu0 %v333
        %v577 = vpop.f32.mrf.mxu0
        %v578 = vadd.f32 %v465, %v577
        %579 = vmatmul.f32.gmra.mxu0 %v335
        %v580 = vpop.f32.mrf.mxu0
        %v581 = vadd.f32 %v468, %v580
        %582 = vmatmul.f32.gmra.mxu0 %v337
        %v583 = vpop.f32.mrf.mxu0
        %v584 = vadd.f32 %v471, %v583
        %585 = vmatmul.f32.gmra.mxu0 %v339
        %v586 = vpop.f32.mrf.mxu0
        %v587 = vadd.f32 %v474, %v586
        %588 = vmatmul.f32.gmra.mxu0 %v341
        %v589 = vpop.f32.mrf.mxu0
        %v590 = vadd.f32 %v477, %v589
        %591 = vmatmul.f32.gmra.mxu0 %v343
        %v592 = vpop.f32.mrf.mxu0
        %v593 = vadd.f32 %v480, %v592
        %594 = vmatmul.f32.gmra.mxu0 %v345
        %v595 = vpop.f32.mrf.mxu0
        %v596 = vadd.f32 %v483, %v595
        %597 = vmatmul.f32.gmra.mxu0 %v347
        %v598 = vpop.f32.mrf.mxu0
        %v599 = vadd.f32 %v486, %v598
        %600 = vmatmul.f32.gmra.mxu0 %v349
        %v601 = vpop.f32.mrf.mxu0
        %v602 = vadd.f32 %v489, %v601
        %603 = vmatmul.f32.gmra.mxu0 %v351
        %v604 = vpop.f32.mrf.mxu0
        %v605 = vadd.f32 %v492, %v604
        %606 = vmatmul.f32.gmra.mxu0 %v353
        %v607 = vpop.f32.mrf.mxu0
        %v608 = vadd.f32 %v495, %v607
        %609 = vmatmul.f32.gmra.mxu0 %v355
        %v610 = vpop.f32.mrf.mxu0
        %v611 = vadd.f32 %v498, %v610
        %612 = vmatmul.f32.gmra.mxu0 %v357
        %v613 = vpop.f32.mrf.mxu0
        %v614 = vadd.f32 %v501, %v613
        %615 = vmatmul.f32.gmra.mxu0 %v359
        %v616 = vpop.f32.mrf.mxu0
        %v617 = vadd.f32 %v504, %v616
        %618 = vmatmul.f32.gmra.mxu0 %v361
        %v619 = vpop.f32.mrf.mxu0
        %v620 = vadd.f32 %v507, %v619
        %621 = vmatmul.f32.gmra.mxu0 %v363
        %v622 = vpop.f32.mrf.mxu0
        %v623 = vadd.f32 %v510, %v622
        %624 = vmatmul.f32.gmra.mxu0 %v365
        %v625 = vpop.f32.mrf.mxu0
        %v626 = vadd.f32 %v513, %v625
        %627 = vdwg.mxu0
        %v628 = vmax.f32 %v533, 0.0
        %v629 = vmax.f32 %v536, 0.0
        %v630 = vmax.f32 %v539, 0.0
        %v631 = vmax.f32 %v542, 0.0
        %v632 = vmax.f32 %v545, 0.0
        %v633 = vmax.f32 %v548, 0.0
        %v634 = vmax.f32 %v551, 0.0
        %v635 = vmax.f32 %v554, 0.0
        %v636 = vmax.f32 %v557, 0.0
        %v637 = vmax.f32 %v560, 0.0
        %v638 = vmax.f32 %v563, 0.0
        %v639 = vmax.f32 %v566, 0.0
        %v640 = vmax.f32 %v569, 0.0
        %v641 = vmax.f32 %v572, 0.0
        %v642 = vmax.f32 %v575, 0.0
        %v643 = vmax.f32 %v578, 0.0
        %v644 = vmax.f32 %v581, 0.0
        %v645 = vmax.f32 %v584, 0.0
        %v646 = vmax.f32 %v587, 0.0
        %v647 = vmax.f32 %v590, 0.0
        %v648 = vmax.f32 %v593, 0.0
        %v649 = vmax.f32 %v596, 0.0
        %v650 = vmax.f32 %v599, 0.0
        %v651 = vmax.f32 %v602, 0.0
        %v652 = vmax.f32 %v605, 0.0
        %v653 = vmax.f32 %v608, 0.0
        %v654 = vmax.f32 %v611, 0.0
        %v655 = vmax.f32 %v614, 0.0
        %v656 = vmax.f32 %v617, 0.0
        %v657 = vmax.f32 %v620, 0.0
        %v658 = vmax.f32 %v623, 0.0
        %v659 = vmax.f32 %v626, 0.0
        %v660 = vld [vmem:[%s3] sm:$0xff]
        %v661 = vld [vmem:[%s3 + $0x8] sm:$0xff]
        %v662 = vld [vmem:[%s3 + $0x10] sm:$0xff]
        %v663 = vld [vmem:[%s3 + $0x18] sm:$0xff]
        %v664 = vld [vmem:[%s4] sm:$0x1]
        %v666 = vperm.slane %v664, 0
        %vm668 = vcmask 261120
        %v670 = vsel %vm668, %v628, 0
        %v673 = vsel %vm668, %v629, 0
        %v676 = vsel %vm668, %v630, 0
        %v679 = vsel %vm668, %v631, 0
        %v682 = vsel %vm668, %v632, 0
        %v685 = vsel %vm668, %v633, 0
        %v688 = vsel %vm668, %v634, 0
        %v691 = vsel %vm668, %v635, 0
        %v694 = vsel %vm668, %v636, 0
        %v697 = vsel %vm668, %v637, 0
        %v700 = vsel %vm668, %v638, 0
        %v703 = vsel %vm668, %v639, 0
        %v706 = vsel %vm668, %v640, 0
        %v709 = vsel %vm668, %v641, 0
        %v712 = vsel %vm668, %v642, 0
        %v715 = vsel %vm668, %v643, 0
        %v718 = vsel %vm668, %v644, 0
        %v721 = vsel %vm668, %v645, 0
        %v724 = vsel %vm668, %v646, 0
        %v727 = vsel %vm668, %v647, 0
        %v730 = vsel %vm668, %v648, 0
        %v733 = vsel %vm668, %v649, 0
        %v736 = vsel %vm668, %v650, 0
        %v739 = vsel %vm668, %v651, 0
        %v742 = vsel %vm668, %v652, 0
        %v745 = vsel %vm668, %v653, 0
        %v748 = vsel %vm668, %v654, 0
        %v751 = vsel %vm668, %v655, 0
        %v754 = vsel %vm668, %v656, 0
        %v757 = vsel %vm668, %v657, 0
        %v760 = vsel %vm668, %v658, 0
        %v763 = vsel %vm668, %v659, 0
        %765 = vmatpush.msra.mxu0 0.0
        %766 = vmatpush.msra.mxu0 0.0
        %767 = vmatpush.msra.mxu0 0.0
        %768 = vmatpush.msra.mxu0 0.0
        %769 = vmatpush.msra.mxu0 0.0
        %770 = vmatpush.msra.mxu0 0.0
        %771 = vmatpush.msra.mxu0 0.0
        %772 = vmatpush.msra.mxu0 0.0
        %773 = vmatpush.msra.mxu0 0.0
        %774 = vmatpush.msra.mxu0 0.0
        %775 = vmatpush.msra.mxu0 0.0
        %776 = vmatpush.msra.mxu0 0.0
        %777 = vmatpush.msra.mxu0 %v663
        %778 = vmatpush.msra.mxu0 %v662
        %779 = vmatpush.msra.mxu0 %v661
        %780 = vmatpush.msra.mxu0 %v660
        %781 = vmatmul.f32.gmra.mxu0 %v670
        %v782 = vpop.f32.mrf.mxu0
        %v783 = vadd.f32 %v666, %v782
        %784 = vmatmul.f32.gmra.mxu0 %v673
        %v785 = vpop.f32.mrf.mxu0
        %v786 = vadd.f32 %v666, %v785
        %787 = vmatmul.f32.gmra.mxu0 %v676
        %v788 = vpop.f32.mrf.mxu0
        %v789 = vadd.f32 %v666, %v788
        %790 = vmatmul.f32.gmra.mxu0 %v679
        %v791 = vpop.f32.mrf.mxu0
        %v792 = vadd.f32 %v666, %v791
        %793 = vmatmul.f32.gmra.mxu0 %v682
        %v794 = vpop.f32.mrf.mxu0
        %v795 = vadd.f32 %v666, %v794
        %796 = vmatmul.f32.gmra.mxu0 %v685
        %v797 = vpop.f32.mrf.mxu0
        %v798 = vadd.f32 %v666, %v797
        %799 = vmatmul.f32.gmra.mxu0 %v688
        %v800 = vpop.f32.mrf.mxu0
        %v801 = vadd.f32 %v666, %v800
        %802 = vmatmul.f32.gmra.mxu0 %v691
        %v803 = vpop.f32.mrf.mxu0
        %v804 = vadd.f32 %v666, %v803
        %805 = vmatmul.f32.gmra.mxu0 %v694
        %v806 = vpop.f32.mrf.mxu0
        %v807 = vadd.f32 %v666, %v806
        %808 = vmatmul.f32.gmra.mxu0 %v697
        %v809 = vpop.f32.mrf.mxu0
        %v810 = vadd.f32 %v666, %v809
        %811 = vmatmul.f32.gmra.mxu0 %v700
        %v812 = vpop.f32.mrf.mxu0
        %v813 = vadd.f32 %v666, %v812
        %814 = vmatmul.f32.gmra.mxu0 %v703
        %v815 = vpop.f32.mrf.mxu0
        %v816 = vadd.f32 %v666, %v815
        %817 = vmatmul.f32.gmra.mxu0 %v706
        %v818 = vpop.f32.mrf.mxu0
        %v819 = vadd.f32 %v666, %v818
        %820 = vmatmul.f32.gmra.mxu0 %v709
        %v821 = vpop.f32.mrf.mxu0
        %v822 = vadd.f32 %v666, %v821
        %823 = vmatmul.f32.gmra.mxu0 %v712
        %v824 = vpop.f32.mrf.mxu0
        %v825 = vadd.f32 %v666, %v824
        %826 = vmatmul.f32.gmra.mxu0 %v715
        %v827 = vpop.f32.mrf.mxu0
        %v828 = vadd.f32 %v666, %v827
        %829 = vmatmul.f32.gmra.mxu0 %v718
        %v830 = vpop.f32.mrf.mxu0
        %v831 = vadd.f32 %v666, %v830
        %832 = vmatmul.f32.gmra.mxu0 %v721
        %v833 = vpop.f32.mrf.mxu0
        %v834 = vadd.f32 %v666, %v833
        %835 = vmatmul.f32.gmra.mxu0 %v724
        %v836 = vpop.f32.mrf.mxu0
        %v837 = vadd.f32 %v666, %v836
        %838 = vmatmul.f32.gmra.mxu0 %v727
        %v839 = vpop.f32.mrf.mxu0
        %v840 = vadd.f32 %v666, %v839
        %841 = vmatmul.f32.gmra.mxu0 %v730
        %v842 = vpop.f32.mrf.mxu0
        %v843 = vadd.f32 %v666, %v842
        %844 = vmatmul.f32.gmra.mxu0 %v733
        %v845 = vpop.f32.mrf.mxu0
        %v846 = vadd.f32 %v666, %v845
        %847 = vmatmul.f32.gmra.mxu0 %v736
        %v848 = vpop.f32.mrf.mxu0
        %v849 = vadd.f32 %v666, %v848
        %850 = vmatmul.f32.gmra.mxu0 %v739
        %v851 = vpop.f32.mrf.mxu0
        %v852 = vadd.f32 %v666, %v851
        %853 = vmatmul.f32.gmra.mxu0 %v742
        %v854 = vpop.f32.mrf.mxu0
        %v855 = vadd.f32 %v666, %v854
        %856 = vmatmul.f32.gmra.mxu0 %v745
        %v857 = vpop.f32.mrf.mxu0
        %v858 = vadd.f32 %v666, %v857
        %859 = vmatmul.f32.gmra.mxu0 %v748
        %v860 = vpop.f32.mrf.mxu0
        %v861 = vadd.f32 %v666, %v860
        %862 = vmatmul.f32.gmra.mxu0 %v751
        %v863 = vpop.f32.mrf.mxu0
        %v864 = vadd.f32 %v666, %v863
        %865 = vmatmul.f32.gmra.mxu0 %v754
        %v866 = vpop.f32.mrf.mxu0
        %v867 = vadd.f32 %v666, %v866
        %868 = vmatmul.f32.gmra.mxu0 %v757
        %v869 = vpop.f32.mrf.mxu0
        %v870 = vadd.f32 %v666, %v869
        %871 = vmatmul.f32.gmra.mxu0 %v760
        %v872 = vpop.f32.mrf.mxu0
        %v873 = vadd.f32 %v666, %v872
        %874 = vmatmul.f32.gmra.mxu0 %v763
        %v875 = vpop.f32.mrf.mxu0
        %v876 = vadd.f32 %v666, %v875
        %877 = vdwg.mxu0
        %v878 = vmax.f32 %v783, 0.0
        %v879 = vmax.f32 %v786, 0.0
        %v880 = vmax.f32 %v789, 0.0
        %v881 = vmax.f32 %v792, 0.0
        %v882 = vmax.f32 %v795, 0.0
        %v883 = vmax.f32 %v798, 0.0
        %v884 = vmax.f32 %v801, 0.0
        %v885 = vmax.f32 %v804, 0.0
        %v886 = vmax.f32 %v807, 0.0
        %v887 = vmax.f32 %v810, 0.0
        %v888 = vmax.f32 %v813, 0.0
        %v889 = vmax.f32 %v816, 0.0
        %v890 = vmax.f32 %v819, 0.0
        %v891 = vmax.f32 %v822, 0.0
        %v892 = vmax.f32 %v825, 0.0
        %v893 = vmax.f32 %v828, 0.0
        %v894 = vmax.f32 %v831, 0.0
        %v895 = vmax.f32 %v834, 0.0
        %v896 = vmax.f32 %v837, 0.0
        %v897 = vmax.f32 %v840, 0.0
        %v898 = vmax.f32 %v843, 0.0
        %v899 = vmax.f32 %v846, 0.0
        %v900 = vmax.f32 %v849, 0.0
        %v901 = vmax.f32 %v852, 0.0
        %v902 = vmax.f32 %v855, 0.0
        %v903 = vmax.f32 %v858, 0.0
        %v904 = vmax.f32 %v861, 0.0
        %v905 = vmax.f32 %v864, 0.0
        %v906 = vmax.f32 %v867, 0.0
        %v907 = vmax.f32 %v870, 0.0
        %v908 = vmax.f32 %v873, 0.0
        %v909 = vmax.f32 %v876, 0.0
        %v910 = vld [vmem:[%s5] sm:$0xff]
        %v911 = vld [vmem:[%s5 + $0x8] sm:$0xff]
        %v912 = vld [vmem:[%s5 + $0x10] sm:$0xff]
        %v913 = vld [vmem:[%s5 + $0x18] sm:$0xff]
        %v914 = vld [vmem:[%s6] sm:$0x3]
        %v916 = vperm.slane %v914, 0
        %v917 = vperm.slane %v914, 1
        %vm920 = vcmask 130048
        %v922 = vsel %vm920, %v878, 0
        %v925 = vsel %vm920, %v879, 0
        %v928 = vsel %vm920, %v880, 0
        %v931 = vsel %vm920, %v881, 0
        %v934 = vsel %vm920, %v882, 0
        %v937 = vsel %vm920, %v883, 0
        %v940 = vsel %vm920, %v884, 0
        %v943 = vsel %vm920, %v885, 0
        %v946 = vsel %vm920, %v886, 0
        %v949 = vsel %vm920, %v887, 0
        %v952 = vsel %vm920, %v888, 0
        %v955 = vsel %vm920, %v889, 0
        %v958 = vsel %vm920, %v890, 0
        %v961 = vsel %vm920, %v891, 0
        %v964 = vsel %vm920, %v892, 0
        %v967 = vsel %vm920, %v893, 0
        %v970 = vsel %vm920, %v894, 0
        %v973 = vsel %vm920, %v895, 0
        %v976 = vsel %vm920, %v896, 0
        %v979 = vsel %vm920, %v897, 0
        %v982 = vsel %vm920, %v898, 0
        %v985 = vsel %vm920, %v899, 0
        %v988 = vsel %vm920, %v900, 0
        %v991 = vsel %vm920, %v901, 0
        %v994 = vsel %vm920, %v902, 0
        %v997 = vsel %vm920, %v903, 0
        %v1000 = vsel %vm920, %v904, 0
        %v1003 = vsel %vm920, %v905, 0
        %v1006 = vsel %vm920, %v906, 0
        %v1009 = vsel %vm920, %v907, 0
        %v1012 = vsel %vm920, %v908, 0
        %v1015 = vsel %vm920, %v909, 0
        %1017 = vmatpush.msra.mxu0 0.0
        %1018 = vmatpush.msra.mxu0 0.0
        %1019 = vmatpush.msra.mxu0 0.0
        %1020 = vmatpush.msra.mxu0 0.0
        %1021 = vmatpush.msra.mxu0 0.0
        %1022 = vmatpush.msra.mxu0 0.0
        %1023 = vmatpush.msra.mxu0 0.0
        %1024 = vmatpush.msra.mxu0 0.0
        %1025 = vmatpush.msra.mxu0 0.0
        %1026 = vmatpush.msra.mxu0 0.0
        %1027 = vmatpush.msra.mxu0 0.0
        %1028 = vmatpush.msra.mxu0 0.0
        %1029 = vmatpush.msra.mxu0 0.0
        %1030 = vmatpush.msra.mxu0 0.0
        %1031 = vmatpush.msra.mxu0 %v912
        %1032 = vmatpush.msra.mxu0 %v910
        %1033 = vmatmul.f32.gmra.mxu0 %v922
        %v1034 = vpop.f32.mrf.mxu0
        %v1035 = vadd.f32 %v916, %v1034
        %1036 = vmatmul.f32.gmra.mxu0 %v925
        %v1037 = vpop.f32.mrf.mxu0
        %v1038 = vadd.f32 %v916, %v1037
        %1039 = vmatmul.f32.gmra.mxu0 %v928
        %v1040 = vpop.f32.mrf.mxu0
        %v1041 = vadd.f32 %v916, %v1040
        %1042 = vmatmul.f32.gmra.mxu0 %v931
        %v1043 = vpop.f32.mrf.mxu0
        %v1044 = vadd.f32 %v916, %v1043
        %1045 = vmatmul.f32.gmra.mxu0 %v934
        %v1046 = vpop.f32.mrf.mxu0
        %v1047 = vadd.f32 %v916, %v1046
        %1048 = vmatmul.f32.gmra.mxu0 %v937
        %v1049 = vpop.f32.mrf.mxu0
        %v1050 = vadd.f32 %v916, %v1049
        %1051 = vmatmul.f32.gmra.mxu0 %v940
        %v1052 = vpop.f32.mrf.mxu0
        %v1053 = vadd.f32 %v916, %v1052
        %1054 = vmatmul.f32.gmra.mxu0 %v943
        %v1055 = vpop.f32.mrf.mxu0
        %v1056 = vadd.f32 %v916, %v1055
        %1057 = vmatmul.f32.gmra.mxu0 %v946
        %v1058 = vpop.f32.mrf.mxu0
        %v1059 = vadd.f32 %v916, %v1058
        %1060 = vmatmul.f32.gmra.mxu0 %v949
        %v1061 = vpop.f32.mrf.mxu0
        %v1062 = vadd.f32 %v916, %v1061
        %1063 = vmatmul.f32.gmra.mxu0 %v952
        %v1064 = vpop.f32.mrf.mxu0
        %v1065 = vadd.f32 %v916, %v1064
        %1066 = vmatmul.f32.gmra.mxu0 %v955
        %v1067 = vpop.f32.mrf.mxu0
        %v1068 = vadd.f32 %v916, %v1067
        %1069 = vmatmul.f32.gmra.mxu0 %v958
        %v1070 = vpop.f32.mrf.mxu0
        %v1071 = vadd.f32 %v916, %v1070
        %1072 = vmatmul.f32.gmra.mxu0 %v961
        %v1073 = vpop.f32.mrf.mxu0
        %v1074 = vadd.f32 %v916, %v1073
        %1075 = vmatmul.f32.gmra.mxu0 %v964
        %v1076 = vpop.f32.mrf.mxu0
        %v1077 = vadd.f32 %v916, %v1076
        %1078 = vmatmul.f32.gmra.mxu0 %v967
        %v1079 = vpop.f32.mrf.mxu0
        %v1080 = vadd.f32 %v916, %v1079
        %1081 = vmatmul.f32.gmra.mxu0 %v970
        %v1082 = vpop.f32.mrf.mxu0
        %v1083 = vadd.f32 %v916, %v1082
        %1084 = vmatmul.f32.gmra.mxu0 %v973
        %v1085 = vpop.f32.mrf.mxu0
        %v1086 = vadd.f32 %v916, %v1085
        %1087 = vmatmul.f32.gmra.mxu0 %v976
        %v1088 = vpop.f32.mrf.mxu0
        %v1089 = vadd.f32 %v916, %v1088
        %1090 = vmatmul.f32.gmra.mxu0 %v979
        %v1091 = vpop.f32.mrf.mxu0
        %v1092 = vadd.f32 %v916, %v1091
        %1093 = vmatmul.f32.gmra.mxu0 %v982
        %v1094 = vpop.f32.mrf.mxu0
        %v1095 = vadd.f32 %v916, %v1094
        %1096 = vmatmul.f32.gmra.mxu0 %v985
        %v1097 = vpop.f32.mrf.mxu0
        %v1098 = vadd.f32 %v916, %v1097
        %1099 = vmatmul.f32.gmra.mxu0 %v988
        %v1100 = vpop.f32.mrf.mxu0
        %v1101 = vadd.f32 %v916, %v1100
        %1102 = vmatmul.f32.gmra.mxu0 %v991
        %v1103 = vpop.f32.mrf.mxu0
        %v1104 = vadd.f32 %v916, %v1103
        %1105 = vmatmul.f32.gmra.mxu0 %v994
        %v1106 = vpop.f32.mrf.mxu0
        %v1107 = vadd.f32 %v916, %v1106
        %1108 = vmatmul.f32.gmra.mxu0 %v997
        %v1109 = vpop.f32.mrf.mxu0
        %v1110 = vadd.f32 %v916, %v1109
        %1111 = vmatmul.f32.gmra.mxu0 %v1000
        %v1112 = vpop.f32.mrf.mxu0
        %v1113 = vadd.f32 %v916, %v1112
        %1114 = vmatmul.f32.gmra.mxu0 %v1003
        %v1115 = vpop.f32.mrf.mxu0
        %v1116 = vadd.f32 %v916, %v1115
        %1117 = vmatmul.f32.gmra.mxu0 %v1006
        %v1118 = vpop.f32.mrf.mxu0
        %v1119 = vadd.f32 %v916, %v1118
        %1120 = vmatmul.f32.gmra.mxu0 %v1009
        %v1121 = vpop.f32.mrf.mxu0
        %v1122 = vadd.f32 %v916, %v1121
        %1123 = vmatmul.f32.gmra.mxu0 %v1012
        %v1124 = vpop.f32.mrf.mxu0
        %v1125 = vadd.f32 %v916, %v1124
        %1126 = vmatmul.f32.gmra.mxu0 %v1015
        %v1127 = vpop.f32.mrf.mxu0
        %v1128 = vadd.f32 %v916, %v1127
        %1129 = vdwg.mxu0
        %1130 = vmatpush.msra.mxu0 0.0
        %1131 = vmatpush.msra.mxu0 0.0
        %1132 = vmatpush.msra.mxu0 0.0
        %1133 = vmatpush.msra.mxu0 0.0
        %1134 = vmatpush.msra.mxu0 0.0
        %1135 = vmatpush.msra.mxu0 0.0
        %1136 = vmatpush.msra.mxu0 0.0
        %1137 = vmatpush.msra.mxu0 0.0
        %1138 = vmatpush.msra.mxu0 0.0
        %1139 = vmatpush.msra.mxu0 0.0
        %1140 = vmatpush.msra.mxu0 0.0
        %1141 = vmatpush.msra.mxu0 0.0
        %1142 = vmatpush.msra.mxu0 0.0
        %1143 = vmatpush.msra.mxu0 0.0
        %1144 = vmatpush.msra.mxu0 %v913
        %1145 = vmatpush.msra.mxu0 %v911
        %1146 = vmatmul.f32.gmra.mxu0 %v922
        %v1147 = vpop.f32.mrf.mxu0
        %v1148 = vadd.f32 %v917, %v1147
        %1149 = vmatmul.f32.gmra.mxu0 %v925
        %v1150 = vpop.f32.mrf.mxu0
        %v1151 = vadd.f32 %v917, %v1150
        %1152 = vmatmul.f32.gmra.mxu0 %v928
        %v1153 = vpop.f32.mrf.mxu0
        %v1154 = vadd.f32 %v917, %v1153
        %1155 = vmatmul.f32.gmra.mxu0 %v931
        %v1156 = vpop.f32.mrf.mxu0
        %v1157 = vadd.f32 %v917, %v1156
        %1158 = vmatmul.f32.gmra.mxu0 %v934
        %v1159 = vpop.f32.mrf.mxu0
        %v1160 = vadd.f32 %v917, %v1159
        %1161 = vmatmul.f32.gmra.mxu0 %v937
        %v1162 = vpop.f32.mrf.mxu0
        %v1163 = vadd.f32 %v917, %v1162
        %1164 = vmatmul.f32.gmra.mxu0 %v940
        %v1165 = vpop.f32.mrf.mxu0
        %v1166 = vadd.f32 %v917, %v1165
        %1167 = vmatmul.f32.gmra.mxu0 %v943
        %v1168 = vpop.f32.mrf.mxu0
        %v1169 = vadd.f32 %v917, %v1168
        %1170 = vmatmul.f32.gmra.mxu0 %v946
        %v1171 = vpop.f32.mrf.mxu0
        %v1172 = vadd.f32 %v917, %v1171
        %1173 = vmatmul.f32.gmra.mxu0 %v949
        %v1174 = vpop.f32.mrf.mxu0
        %v1175 = vadd.f32 %v917, %v1174
        %1176 = vmatmul.f32.gmra.mxu0 %v952
        %v1177 = vpop.f32.mrf.mxu0
        %v1178 = vadd.f32 %v917, %v1177
        %1179 = vmatmul.f32.gmra.mxu0 %v955
        %v1180 = vpop.f32.mrf.mxu0
        %v1181 = vadd.f32 %v917, %v1180
        %1182 = vmatmul.f32.gmra.mxu0 %v958
        %v1183 = vpop.f32.mrf.mxu0
        %v1184 = vadd.f32 %v917, %v1183
        %1185 = vmatmul.f32.gmra.mxu0 %v961
        %v1186 = vpop.f32.mrf.mxu0
        %v1187 = vadd.f32 %v917, %v1186
        %1188 = vmatmul.f32.gmra.mxu0 %v964
        %v1189 = vpop.f32.mrf.mxu0
        %v1190 = vadd.f32 %v917, %v1189
        %1191 = vmatmul.f32.gmra.mxu0 %v967
        %v1192 = vpop.f32.mrf.mxu0
        %v1193 = vadd.f32 %v917, %v1192
        %1194 = vmatmul.f32.gmra.mxu0 %v970
        %v1195 = vpop.f32.mrf.mxu0
        %v1196 = vadd.f32 %v917, %v1195
        %1197 = vmatmul.f32.gmra.mxu0 %v973
        %v1198 = vpop.f32.mrf.mxu0
        %v1199 = vadd.f32 %v917, %v1198
        %1200 = vmatmul.f32.gmra.mxu0 %v976
        %v1201 = vpop.f32.mrf.mxu0
        %v1202 = vadd.f32 %v917, %v1201
        %1203 = vmatmul.f32.gmra.mxu0 %v979
        %v1204 = vpop.f32.mrf.mxu0
        %v1205 = vadd.f32 %v917, %v1204
        %1206 = vmatmul.f32.gmra.mxu0 %v982
        %v1207 = vpop.f32.mrf.mxu0
        %v1208 = vadd.f32 %v917, %v1207
        %1209 = vmatmul.f32.gmra.mxu0 %v985
        %v1210 = vpop.f32.mrf.mxu0
        %v1211 = vadd.f32 %v917, %v1210
        %1212 = vmatmul.f32.gmra.mxu0 %v988
        %v1213 = vpop.f32.mrf.mxu0
        %v1214 = vadd.f32 %v917, %v1213
        %1215 = vmatmul.f32.gmra.mxu0 %v991
        %v1216 = vpop.f32.mrf.mxu0
        %v1217 = vadd.f32 %v917, %v1216
        %1218 = vmatmul.f32.gmra.mxu0 %v994
        %v1219 = vpop.f32.mrf.mxu0
        %v1220 = vadd.f32 %v917, %v1219
        %1221 = vmatmul.f32.gmra.mxu0 %v997
        %v1222 = vpop.f32.mrf.mxu0
        %v1223 = vadd.f32 %v917, %v1222
        %1224 = vmatmul.f32.gmra.mxu0 %v1000
        %v1225 = vpop.f32.mrf.mxu0
        %v1226 = vadd.f32 %v917, %v1225
        %1227 = vmatmul.f32.gmra.mxu0 %v1003
        %v1228 = vpop.f32.mrf.mxu0
        %v1229 = vadd.f32 %v917, %v1228
        %1230 = vmatmul.f32.gmra.mxu0 %v1006
        %v1231 = vpop.f32.mrf.mxu0
        %v1232 = vadd.f32 %v917, %v1231
        %1233 = vmatmul.f32.gmra.mxu0 %v1009
        %v1234 = vpop.f32.mrf.mxu0
        %v1235 = vadd.f32 %v917, %v1234
        %1236 = vmatmul.f32.gmra.mxu0 %v1012
        %v1237 = vpop.f32.mrf.mxu0
        %v1238 = vadd.f32 %v917, %v1237
        %1239 = vmatmul.f32.gmra.mxu0 %v1015
        %v1240 = vpop.f32.mrf.mxu0
        %v1241 = vadd.f32 %v917, %v1240
        %1242 = vdwg.mxu0
        %v1243 = vxor.u32 %v1035, 2147483648
        %v1244 = vxor.u32 %v1148, 2147483648
        %v1245 = vxor.u32 %v1038, 2147483648
        %v1246 = vxor.u32 %v1151, 2147483648
        %v1247 = vxor.u32 %v1041, 2147483648
        %v1248 = vxor.u32 %v1154, 2147483648
        %v1249 = vxor.u32 %v1044, 2147483648
        %v1250 = vxor.u32 %v1157, 2147483648
        %v1251 = vxor.u32 %v1047, 2147483648
        %v1252 = vxor.u32 %v1160, 2147483648
        %v1253 = vxor.u32 %v1050, 2147483648
        %v1254 = vxor.u32 %v1163, 2147483648
        %v1255 = vxor.u32 %v1053, 2147483648
        %v1256 = vxor.u32 %v1166, 2147483648
        %v1257 = vxor.u32 %v1056, 2147483648
        %v1258 = vxor.u32 %v1169, 2147483648
        %v1259 = vxor.u32 %v1059, 2147483648
        %v1260 = vxor.u32 %v1172, 2147483648
        %v1261 = vxor.u32 %v1062, 2147483648
        %v1262 = vxor.u32 %v1175, 2147483648
        %v1263 = vxor.u32 %v1065, 2147483648
        %v1264 = vxor.u32 %v1178, 2147483648
        %v1265 = vxor.u32 %v1068, 2147483648
        %v1266 = vxor.u32 %v1181, 2147483648
        %v1267 = vxor.u32 %v1071, 2147483648
        %v1268 = vxor.u32 %v1184, 2147483648
        %v1269 = vxor.u32 %v1074, 2147483648
        %v1270 = vxor.u32 %v1187, 2147483648
        %v1271 = vxor.u32 %v1077, 2147483648
        %v1272 = vxor.u32 %v1190, 2147483648
        %v1273 = vxor.u32 %v1080, 2147483648
        %v1274 = vxor.u32 %v1193, 2147483648
        %v1275 = vxor.u32 %v1083, 2147483648
        %v1276 = vxor.u32 %v1196, 2147483648
        %v1277 = vxor.u32 %v1086, 2147483648
        %v1278 = vxor.u32 %v1199, 2147483648
        %v1279 = vxor.u32 %v1089, 2147483648
        %v1280 = vxor.u32 %v1202, 2147483648
        %v1281 = vxor.u32 %v1092, 2147483648
        %v1282 = vxor.u32 %v1205, 2147483648
        %v1283 = vxor.u32 %v1095, 2147483648
        %v1284 = vxor.u32 %v1208, 2147483648
        %v1285 = vxor.u32 %v1098, 2147483648
        %v1286 = vxor.u32 %v1211, 2147483648
        %v1287 = vxor.u32 %v1101, 2147483648
        %v1288 = vxor.u32 %v1214, 2147483648
        %v1289 = vxor.u32 %v1104, 2147483648
        %v1290 = vxor.u32 %v1217, 2147483648
        %v1291 = vxor.u32 %v1107, 2147483648
        %v1292 = vxor.u32 %v1220, 2147483648
        %v1293 = vxor.u32 %v1110, 2147483648
        %v1294 = vxor.u32 %v1223, 2147483648
        %v1295 = vxor.u32 %v1113, 2147483648
        %v1296 = vxor.u32 %v1226, 2147483648
        %v1297 = vxor.u32 %v1116, 2147483648
        %v1298 = vxor.u32 %v1229, 2147483648
        %v1299 = vxor.u32 %v1119, 2147483648
        %v1300 = vxor.u32 %v1232, 2147483648
        %v1301 = vxor.u32 %v1122, 2147483648
        %v1302 = vxor.u32 %v1235, 2147483648
        %v1303 = vxor.u32 %v1125, 2147483648
        %v1304 = vxor.u32 %v1238, 2147483648
        %v1305 = vxor.u32 %v1128, 2147483648
        %v1306 = vxor.u32 %v1241, 2147483648
        %v1307 = vmul.f32 %v1243, 1.442695
        %v1308 = vpow.pop %v1307
        %v1309 = vmul.f32 %v1244, 1.442695
        %v1310 = vpow.pop %v1309
        %v1311 = vmul.f32 %v1245, 1.442695
        %v1312 = vpow.pop %v1311
        %v1313 = vmul.f32 %v1246, 1.442695
        %v1314 = vpow.pop %v1313
        %v1315 = vmul.f32 %v1247, 1.442695
        %v1316 = vpow.pop %v1315
        %v1317 = vmul.f32 %v1248, 1.442695
        %v1318 = vpow.pop %v1317
        %v1319 = vmul.f32 %v1249, 1.442695
        %v1320 = vpow.pop %v1319
        %v1321 = vmul.f32 %v1250, 1.442695
        %v1322 = vpow.pop %v1321
        %v1323 = vmul.f32 %v1251, 1.442695
        %v1324 = vpow.pop %v1323
        %v1325 = vmul.f32 %v1252, 1.442695
        %v1326 = vpow.pop %v1325
        %v1327 = vmul.f32 %v1253, 1.442695
        %v1328 = vpow.pop %v1327
        %v1329 = vmul.f32 %v1254, 1.442695
        %v1330 = vpow.pop %v1329
        %v1331 = vmul.f32 %v1255, 1.442695
        %v1332 = vpow.pop %v1331
        %v1333 = vmul.f32 %v1256, 1.442695
        %v1334 = vpow.pop %v1333
        %v1335 = vmul.f32 %v1257, 1.442695
        %v1336 = vpow.pop %v1335
        %v1337 = vmul.f32 %v1258, 1.442695
        %v1338 = vpow.pop %v1337
        %v1339 = vmul.f32 %v1259, 1.442695
        %v1340 = vpow.pop %v1339
        %v1341 = vmul.f32 %v1260, 1.442695
        %v1342 = vpow.pop %v1341
        %v1343 = vmul.f32 %v1261, 1.442695
        %v1344 = vpow.pop %v1343
        %v1345 = vmul.f32 %v1262, 1.442695
        %v1346 = vpow.pop %v1345
        %v1347 = vmul.f32 %v1263, 1.442695
        %v1348 = vpow.pop %v1347
        %v1349 = vmul.f32 %v1264, 1.442695
        %v1350 = vpow.pop %v1349
        %v1351 = vmul.f32 %v1265, 1.442695
        %v1352 = vpow.pop %v1351
        %v1353 = vmul.f32 %v1266, 1.442695
        %v1354 = vpow.pop %v1353
        %v1355 = vmul.f32 %v1267, 1.442695
        %v1356 = vpow.pop %v1355
        %v1357 = vmul.f32 %v1268, 1.442695
        %v1358 = vpow.pop %v1357
        %v1359 = vmul.f32 %v1269, 1.442695
        %v1360 = vpow.pop %v1359
        %v1361 = vmul.f32 %v1270, 1.442695
        %v1362 = vpow.pop %v1361
        %v1363 = vmul.f32 %v1271, 1.442695
        %v1364 = vpow.pop %v1363
        %v1365 = vmul.f32 %v1272, 1.442695
        %v1366 = vpow.pop %v1365
        %v1367 = vmul.f32 %v1273, 1.442695
        %v1368 = vpow.pop %v1367
        %v1369 = vmul.f32 %v1274, 1.442695
        %v1370 = vpow.pop %v1369
        %v1371 = vmul.f32 %v1275, 1.442695
        %v1372 = vpow.pop %v1371
        %v1373 = vmul.f32 %v1276, 1.442695
        %v1374 = vpow.pop %v1373
        %v1375 = vmul.f32 %v1277, 1.442695
        %v1376 = vpow.pop %v1375
        %v1377 = vmul.f32 %v1278, 1.442695
        %v1378 = vpow.pop %v1377
        %v1379 = vmul.f32 %v1279, 1.442695
        %v1380 = vpow.pop %v1379
        %v1381 = vmul.f32 %v1280, 1.442695
        %v1382 = vpow.pop %v1381
        %v1383 = vmul.f32 %v1281, 1.442695
        %v1384 = vpow.pop %v1383
        %v1385 = vmul.f32 %v1282, 1.442695
        %v1386 = vpow.pop %v1385
        %v1387 = vmul.f32 %v1283, 1.442695
        %v1388 = vpow.pop %v1387
        %v1389 = vmul.f32 %v1284, 1.442695
        %v1390 = vpow.pop %v1389
        %v1391 = vmul.f32 %v1285, 1.442695
        %v1392 = vpow.pop %v1391
        %v1393 = vmul.f32 %v1286, 1.442695
        %v1394 = vpow.pop %v1393
        %v1395 = vmul.f32 %v1287, 1.442695
        %v1396 = vpow.pop %v1395
        %v1397 = vmul.f32 %v1288, 1.442695
        %v1398 = vpow.pop %v1397
        %v1399 = vmul.f32 %v1289, 1.442695
        %v1400 = vpow.pop %v1399
        %v1401 = vmul.f32 %v1290, 1.442695
        %v1402 = vpow.pop %v1401
        %v1403 = vmul.f32 %v1291, 1.442695
        %v1404 = vpow.pop %v1403
        %v1405 = vmul.f32 %v1292, 1.442695
        %v1406 = vpow.pop %v1405
        %v1407 = vmul.f32 %v1293, 1.442695
        %v1408 = vpow.pop %v1407
        %v1409 = vmul.f32 %v1294, 1.442695
        %v1410 = vpow.pop %v1409
        %v1411 = vmul.f32 %v1295, 1.442695
        %v1412 = vpow.pop %v1411
        %v1413 = vmul.f32 %v1296, 1.442695
        %v1414 = vpow.pop %v1413
        %v1415 = vmul.f32 %v1297, 1.442695
        %v1416 = vpow.pop %v1415
        %v1417 = vmul.f32 %v1298, 1.442695
        %v1418 = vpow.pop %v1417
        %v1419 = vmul.f32 %v1299, 1.442695
        %v1420 = vpow.pop %v1419
        %v1421 = vmul.f32 %v1300, 1.442695
        %v1422 = vpow.pop %v1421
        %v1423 = vmul.f32 %v1301, 1.442695
        %v1424 = vpow.pop %v1423
        %v1425 = vmul.f32 %v1302, 1.442695
        %v1426 = vpow.pop %v1425
        %v1427 = vmul.f32 %v1303, 1.442695
        %v1428 = vpow.pop %v1427
        %v1429 = vmul.f32 %v1304, 1.442695
        %v1430 = vpow.pop %v1429
        %v1431 = vmul.f32 %v1305, 1.442695
        %v1432 = vpow.pop %v1431
        %v1433 = vmul.f32 %v1306, 1.442695
        %v1434 = vpow.pop %v1433
        %v1435 = vadd.f32 %v1308, 1.0
        %v1436 = vadd.f32 %v1310, 1.0
        %v1437 = vadd.f32 %v1312, 1.0
        %v1438 = vadd.f32 %v1314, 1.0
        %v1439 = vadd.f32 %v1316, 1.0
        %v1440 = vadd.f32 %v1318, 1.0
        %v1441 = vadd.f32 %v1320, 1.0
        %v1442 = vadd.f32 %v1322, 1.0
        %v1443 = vadd.f32 %v1324, 1.0
        %v1444 = vadd.f32 %v1326, 1.0
        %v1445 = vadd.f32 %v1328, 1.0
        %v1446 = vadd.f32 %v1330, 1.0
        %v1447 = vadd.f32 %v1332, 1.0
        %v1448 = vadd.f32 %v1334, 1.0
        %v1449 = vadd.f32 %v1336, 1.0
        %v1450 = vadd.f32 %v1338, 1.0
        %v1451 = vadd.f32 %v1340, 1.0
        %v1452 = vadd.f32 %v1342, 1.0
        %v1453 = vadd.f32 %v1344, 1.0
        %v1454 = vadd.f32 %v1346, 1.0
        %v1455 = vadd.f32 %v1348, 1.0
        %v1456 = vadd.f32 %v1350, 1.0
        %v1457 = vadd.f32 %v1352, 1.0
        %v1458 = vadd.f32 %v1354, 1.0
        %v1459 = vadd.f32 %v1356, 1.0
        %v1460 = vadd.f32 %v1358, 1.0
        %v1461 = vadd.f32 %v1360, 1.0
        %v1462 = vadd.f32 %v1362, 1.0
        %v1463 = vadd.f32 %v1364, 1.0
        %v1464 = vadd.f32 %v1366, 1.0
        %v1465 = vadd.f32 %v1368, 1.0
        %v1466 = vadd.f32 %v1370, 1.0
        %v1467 = vadd.f32 %v1372, 1.0
        %v1468 = vadd.f32 %v1374, 1.0
        %v1469 = vadd.f32 %v1376, 1.0
        %v1470 = vadd.f32 %v1378, 1.0
        %v1471 = vadd.f32 %v1380, 1.0
        %v1472 = vadd.f32 %v1382, 1.0
        %v1473 = vadd.f32 %v1384, 1.0
        %v1474 = vadd.f32 %v1386, 1.0
        %v1475 = vadd.f32 %v1388, 1.0
        %v1476 = vadd.f32 %v1390, 1.0
        %v1477 = vadd.f32 %v1392, 1.0
        %v1478 = vadd.f32 %v1394, 1.0
        %v1479 = vadd.f32 %v1396, 1.0
        %v1480 = vadd.f32 %v1398, 1.0
        %v1481 = vadd.f32 %v1400, 1.0
        %v1482 = vadd.f32 %v1402, 1.0
        %v1483 = vadd.f32 %v1404, 1.0
        %v1484 = vadd.f32 %v1406, 1.0
        %v1485 = vadd.f32 %v1408, 1.0
        %v1486 = vadd.f32 %v1410, 1.0
        %v1487 = vadd.f32 %v1412, 1.0
        %v1488 = vadd.f32 %v1414, 1.0
        %v1489 = vadd.f32 %v1416, 1.0
        %v1490 = vadd.f32 %v1418, 1.0
        %v1491 = vadd.f32 %v1420, 1.0
        %v1492 = vadd.f32 %v1422, 1.0
        %v1493 = vadd.f32 %v1424, 1.0
        %v1494 = vadd.f32 %v1426, 1.0
        %v1495 = vadd.f32 %v1428, 1.0
        %v1496 = vadd.f32 %v1430, 1.0
        %v1497 = vadd.f32 %v1432, 1.0
        %v1498 = vadd.f32 %v1434, 1.0
        %v1499 = vrcp.pop %v1435
        %v1500 = vmul.f32 %v1435, %v1499
        %v1501 = vsub.f32 1.0, %v1500
        %v1502 = vmul.f32 %v1499, %v1501
        %v1503 = vadd.f32 %v1499, %v1502
        %vm1504 = vweird.f32 %v1435
        %vm1505 = vweird.f32 %v1499
        %vm1506 = vmor %vm1504, %vm1505
        %v1507 = vsel %vm1506, %v1499, %v1503
        %v1508 = vand.u32 2147483647, %v1435
        %vm1509 = vcmp.eq.f32.partialorder %v1508, 8.507059e+37
        %v1510 = vand.u32 %v1435, 2147483648
        %v1511 = vor.u32 1.1754944e-38, %v1510
        %v1512 = vsel %vm1509, %v1511, %v1507
        %v1513 = vmul.f32 1.0, %v1512
        %v1514 = vrcp.pop %v1436
        %v1515 = vmul.f32 %v1436, %v1514
        %v1516 = vsub.f32 1.0, %v1515
        %v1517 = vmul.f32 %v1514, %v1516
        %v1518 = vadd.f32 %v1514, %v1517
        %vm1519 = vweird.f32 %v1436
        %vm1520 = vweird.f32 %v1514
        %vm1521 = vmor %vm1519, %vm1520
        %v1522 = vsel %vm1521, %v1514, %v1518
        %v1523 = vand.u32 2147483647, %v1436
        %vm1524 = vcmp.eq.f32.partialorder %v1523, 8.507059e+37
        %v1525 = vand.u32 %v1436, 2147483648
        %v1526 = vor.u32 1.1754944e-38, %v1525
        %v1527 = vsel %vm1524, %v1526, %v1522
        %v1528 = vmul.f32 1.0, %v1527
        %v1529 = vrcp.pop %v1437
        %v1530 = vmul.f32 %v1437, %v1529
        %v1531 = vsub.f32 1.0, %v1530
        %v1532 = vmul.f32 %v1529, %v1531
        %v1533 = vadd.f32 %v1529, %v1532
        %vm1534 = vweird.f32 %v1437
        %vm1535 = vweird.f32 %v1529
        %vm1536 = vmor %vm1534, %vm1535
        %v1537 = vsel %vm1536, %v1529, %v1533
        %v1538 = vand.u32 2147483647, %v1437
        %vm1539 = vcmp.eq.f32.partialorder %v1538, 8.507059e+37
        %v1540 = vand.u32 %v1437, 2147483648
        %v1541 = vor.u32 1.1754944e-38, %v1540
        %v1542 = vsel %vm1539, %v1541, %v1537
        %v1543 = vmul.f32 1.0, %v1542
        %v1544 = vrcp.pop %v1438
        %v1545 = vmul.f32 %v1438, %v1544
        %v1546 = vsub.f32 1.0, %v1545
        %v1547 = vmul.f32 %v1544, %v1546
        %v1548 = vadd.f32 %v1544, %v1547
        %vm1549 = vweird.f32 %v1438
        %vm1550 = vweird.f32 %v1544
        %vm1551 = vmor %vm1549, %vm1550
        %v1552 = vsel %vm1551, %v1544, %v1548
        %v1553 = vand.u32 2147483647, %v1438
        %vm1554 = vcmp.eq.f32.partialorder %v1553, 8.507059e+37
        %v1555 = vand.u32 %v1438, 2147483648
        %v1556 = vor.u32 1.1754944e-38, %v1555
        %v1557 = vsel %vm1554, %v1556, %v1552
        %v1558 = vmul.f32 1.0, %v1557
        %v1559 = vrcp.pop %v1439
        %v1560 = vmul.f32 %v1439, %v1559
        %v1561 = vsub.f32 1.0, %v1560
        %v1562 = vmul.f32 %v1559, %v1561
        %v1563 = vadd.f32 %v1559, %v1562
        %vm1564 = vweird.f32 %v1439
        %vm1565 = vweird.f32 %v1559
        %vm1566 = vmor %vm1564, %vm1565
        %v1567 = vsel %vm1566, %v1559, %v1563
        %v1568 = vand.u32 2147483647, %v1439
        %vm1569 = vcmp.eq.f32.partialorder %v1568, 8.507059e+37
        %v1570 = vand.u32 %v1439, 2147483648
        %v1571 = vor.u32 1.1754944e-38, %v1570
        %v1572 = vsel %vm1569, %v1571, %v1567
        %v1573 = vmul.f32 1.0, %v1572
        %v1574 = vrcp.pop %v1440
        %v1575 = vmul.f32 %v1440, %v1574
        %v1576 = vsub.f32 1.0, %v1575
        %v1577 = vmul.f32 %v1574, %v1576
        %v1578 = vadd.f32 %v1574, %v1577
        %vm1579 = vweird.f32 %v1440
        %vm1580 = vweird.f32 %v1574
        %vm1581 = vmor %vm1579, %vm1580
        %v1582 = vsel %vm1581, %v1574, %v1578
        %v1583 = vand.u32 2147483647, %v1440
        %vm1584 = vcmp.eq.f32.partialorder %v1583, 8.507059e+37
        %v1585 = vand.u32 %v1440, 2147483648
        %v1586 = vor.u32 1.1754944e-38, %v1585
        %v1587 = vsel %vm1584, %v1586, %v1582
        %v1588 = vmul.f32 1.0, %v1587
        %v1589 = vrcp.pop %v1441
        %v1590 = vmul.f32 %v1441, %v1589
        %v1591 = vsub.f32 1.0, %v1590
        %v1592 = vmul.f32 %v1589, %v1591
        %v1593 = vadd.f32 %v1589, %v1592
        %vm1594 = vweird.f32 %v1441
        %vm1595 = vweird.f32 %v1589
        %vm1596 = vmor %vm1594, %vm1595
        %v1597 = vsel %vm1596, %v1589, %v1593
        %v1598 = vand.u32 2147483647, %v1441
        %vm1599 = vcmp.eq.f32.partialorder %v1598, 8.507059e+37
        %v1600 = vand.u32 %v1441, 2147483648
        %v1601 = vor.u32 1.1754944e-38, %v1600
        %v1602 = vsel %vm1599, %v1601, %v1597
        %v1603 = vmul.f32 1.0, %v1602
        %v1604 = vrcp.pop %v1442
        %v1605 = vmul.f32 %v1442, %v1604
        %v1606 = vsub.f32 1.0, %v1605
        %v1607 = vmul.f32 %v1604, %v1606
        %v1608 = vadd.f32 %v1604, %v1607
        %vm1609 = vweird.f32 %v1442
        %vm1610 = vweird.f32 %v1604
        %vm1611 = vmor %vm1609, %vm1610
        %v1612 = vsel %vm1611, %v1604, %v1608
        %v1613 = vand.u32 2147483647, %v1442
        %vm1614 = vcmp.eq.f32.partialorder %v1613, 8.507059e+37
        %v1615 = vand.u32 %v1442, 2147483648
        %v1616 = vor.u32 1.1754944e-38, %v1615
        %v1617 = vsel %vm1614, %v1616, %v1612
        %v1618 = vmul.f32 1.0, %v1617
        %v1619 = vrcp.pop %v1443
        %v1620 = vmul.f32 %v1443, %v1619
        %v1621 = vsub.f32 1.0, %v1620
        %v1622 = vmul.f32 %v1619, %v1621
        %v1623 = vadd.f32 %v1619, %v1622
        %vm1624 = vweird.f32 %v1443
        %vm1625 = vweird.f32 %v1619
        %vm1626 = vmor %vm1624, %vm1625
        %v1627 = vsel %vm1626, %v1619, %v1623
        %v1628 = vand.u32 2147483647, %v1443
        %vm1629 = vcmp.eq.f32.partialorder %v1628, 8.507059e+37
        %v1630 = vand.u32 %v1443, 2147483648
        %v1631 = vor.u32 1.1754944e-38, %v1630
        %v1632 = vsel %vm1629, %v1631, %v1627
        %v1633 = vmul.f32 1.0, %v1632
        %v1634 = vrcp.pop %v1444
        %v1635 = vmul.f32 %v1444, %v1634
        %v1636 = vsub.f32 1.0, %v1635
        %v1637 = vmul.f32 %v1634, %v1636
        %v1638 = vadd.f32 %v1634, %v1637
        %vm1639 = vweird.f32 %v1444
        %vm1640 = vweird.f32 %v1634
        %vm1641 = vmor %vm1639, %vm1640
        %v1642 = vsel %vm1641, %v1634, %v1638
        %v1643 = vand.u32 2147483647, %v1444
        %vm1644 = vcmp.eq.f32.partialorder %v1643, 8.507059e+37
        %v1645 = vand.u32 %v1444, 2147483648
        %v1646 = vor.u32 1.1754944e-38, %v1645
        %v1647 = vsel %vm1644, %v1646, %v1642
        %v1648 = vmul.f32 1.0, %v1647
        %v1649 = vrcp.pop %v1445
        %v1650 = vmul.f32 %v1445, %v1649
        %v1651 = vsub.f32 1.0, %v1650
        %v1652 = vmul.f32 %v1649, %v1651
        %v1653 = vadd.f32 %v1649, %v1652
        %vm1654 = vweird.f32 %v1445
        %vm1655 = vweird.f32 %v1649
        %vm1656 = vmor %vm1654, %vm1655
        %v1657 = vsel %vm1656, %v1649, %v1653
        %v1658 = vand.u32 2147483647, %v1445
        %vm1659 = vcmp.eq.f32.partialorder %v1658, 8.507059e+37
        %v1660 = vand.u32 %v1445, 2147483648
        %v1661 = vor.u32 1.1754944e-38, %v1660
        %v1662 = vsel %vm1659, %v1661, %v1657
        %v1663 = vmul.f32 1.0, %v1662
        %v1664 = vrcp.pop %v1446
        %v1665 = vmul.f32 %v1446, %v1664
        %v1666 = vsub.f32 1.0, %v1665
        %v1667 = vmul.f32 %v1664, %v1666
        %v1668 = vadd.f32 %v1664, %v1667
        %vm1669 = vweird.f32 %v1446
        %vm1670 = vweird.f32 %v1664
        %vm1671 = vmor %vm1669, %vm1670
        %v1672 = vsel %vm1671, %v1664, %v1668
        %v1673 = vand.u32 2147483647, %v1446
        %vm1674 = vcmp.eq.f32.partialorder %v1673, 8.507059e+37
        %v1675 = vand.u32 %v1446, 2147483648
        %v1676 = vor.u32 1.1754944e-38, %v1675
        %v1677 = vsel %vm1674, %v1676, %v1672
        %v1678 = vmul.f32 1.0, %v1677
        %v1679 = vrcp.pop %v1447
        %v1680 = vmul.f32 %v1447, %v1679
        %v1681 = vsub.f32 1.0, %v1680
        %v1682 = vmul.f32 %v1679, %v1681
        %v1683 = vadd.f32 %v1679, %v1682
        %vm1684 = vweird.f32 %v1447
        %vm1685 = vweird.f32 %v1679
        %vm1686 = vmor %vm1684, %vm1685
        %v1687 = vsel %vm1686, %v1679, %v1683
        %v1688 = vand.u32 2147483647, %v1447
        %vm1689 = vcmp.eq.f32.partialorder %v1688, 8.507059e+37
        %v1690 = vand.u32 %v1447, 2147483648
        %v1691 = vor.u32 1.1754944e-38, %v1690
        %v1692 = vsel %vm1689, %v1691, %v1687
        %v1693 = vmul.f32 1.0, %v1692
        %v1694 = vrcp.pop %v1448
        %v1695 = vmul.f32 %v1448, %v1694
        %v1696 = vsub.f32 1.0, %v1695
        %v1697 = vmul.f32 %v1694, %v1696
        %v1698 = vadd.f32 %v1694, %v1697
        %vm1699 = vweird.f32 %v1448
        %vm1700 = vweird.f32 %v1694
        %vm1701 = vmor %vm1699, %vm1700
        %v1702 = vsel %vm1701, %v1694, %v1698
        %v1703 = vand.u32 2147483647, %v1448
        %vm1704 = vcmp.eq.f32.partialorder %v1703, 8.507059e+37
        %v1705 = vand.u32 %v1448, 2147483648
        %v1706 = vor.u32 1.1754944e-38, %v1705
        %v1707 = vsel %vm1704, %v1706, %v1702
        %v1708 = vmul.f32 1.0, %v1707
        %v1709 = vrcp.pop %v1449
        %v1710 = vmul.f32 %v1449, %v1709
        %v1711 = vsub.f32 1.0, %v1710
        %v1712 = vmul.f32 %v1709, %v1711
        %v1713 = vadd.f32 %v1709, %v1712
        %vm1714 = vweird.f32 %v1449
        %vm1715 = vweird.f32 %v1709
        %vm1716 = vmor %vm1714, %vm1715
        %v1717 = vsel %vm1716, %v1709, %v1713
        %v1718 = vand.u32 2147483647, %v1449
        %vm1719 = vcmp.eq.f32.partialorder %v1718, 8.507059e+37
        %v1720 = vand.u32 %v1449, 2147483648
        %v1721 = vor.u32 1.1754944e-38, %v1720
        %v1722 = vsel %vm1719, %v1721, %v1717
        %v1723 = vmul.f32 1.0, %v1722
        %v1724 = vrcp.pop %v1450
        %v1725 = vmul.f32 %v1450, %v1724
        %v1726 = vsub.f32 1.0, %v1725
        %v1727 = vmul.f32 %v1724, %v1726
        %v1728 = vadd.f32 %v1724, %v1727
        %vm1729 = vweird.f32 %v1450
        %vm1730 = vweird.f32 %v1724
        %vm1731 = vmor %vm1729, %vm1730
        %v1732 = vsel %vm1731, %v1724, %v1728
        %v1733 = vand.u32 2147483647, %v1450
        %vm1734 = vcmp.eq.f32.partialorder %v1733, 8.507059e+37
        %v1735 = vand.u32 %v1450, 2147483648
        %v1736 = vor.u32 1.1754944e-38, %v1735
        %v1737 = vsel %vm1734, %v1736, %v1732
        %v1738 = vmul.f32 1.0, %v1737
        %v1739 = vrcp.pop %v1451
        %v1740 = vmul.f32 %v1451, %v1739
        %v1741 = vsub.f32 1.0, %v1740
        %v1742 = vmul.f32 %v1739, %v1741
        %v1743 = vadd.f32 %v1739, %v1742
        %vm1744 = vweird.f32 %v1451
        %vm1745 = vweird.f32 %v1739
        %vm1746 = vmor %vm1744, %vm1745
        %v1747 = vsel %vm1746, %v1739, %v1743
        %v1748 = vand.u32 2147483647, %v1451
        %vm1749 = vcmp.eq.f32.partialorder %v1748, 8.507059e+37
        %v1750 = vand.u32 %v1451, 2147483648
        %v1751 = vor.u32 1.1754944e-38, %v1750
        %v1752 = vsel %vm1749, %v1751, %v1747
        %v1753 = vmul.f32 1.0, %v1752
        %v1754 = vrcp.pop %v1452
        %v1755 = vmul.f32 %v1452, %v1754
        %v1756 = vsub.f32 1.0, %v1755
        %v1757 = vmul.f32 %v1754, %v1756
        %v1758 = vadd.f32 %v1754, %v1757
        %vm1759 = vweird.f32 %v1452
        %vm1760 = vweird.f32 %v1754
        %vm1761 = vmor %vm1759, %vm1760
        %v1762 = vsel %vm1761, %v1754, %v1758
        %v1763 = vand.u32 2147483647, %v1452
        %vm1764 = vcmp.eq.f32.partialorder %v1763, 8.507059e+37
        %v1765 = vand.u32 %v1452, 2147483648
        %v1766 = vor.u32 1.1754944e-38, %v1765
        %v1767 = vsel %vm1764, %v1766, %v1762
        %v1768 = vmul.f32 1.0, %v1767
        %v1769 = vrcp.pop %v1453
        %v1770 = vmul.f32 %v1453, %v1769
        %v1771 = vsub.f32 1.0, %v1770
        %v1772 = vmul.f32 %v1769, %v1771
        %v1773 = vadd.f32 %v1769, %v1772
        %vm1774 = vweird.f32 %v1453
        %vm1775 = vweird.f32 %v1769
        %vm1776 = vmor %vm1774, %vm1775
        %v1777 = vsel %vm1776, %v1769, %v1773
        %v1778 = vand.u32 2147483647, %v1453
        %vm1779 = vcmp.eq.f32.partialorder %v1778, 8.507059e+37
        %v1780 = vand.u32 %v1453, 2147483648
        %v1781 = vor.u32 1.1754944e-38, %v1780
        %v1782 = vsel %vm1779, %v1781, %v1777
        %v1783 = vmul.f32 1.0, %v1782
        %v1784 = vrcp.pop %v1454
        %v1785 = vmul.f32 %v1454, %v1784
        %v1786 = vsub.f32 1.0, %v1785
        %v1787 = vmul.f32 %v1784, %v1786
        %v1788 = vadd.f32 %v1784, %v1787
        %vm1789 = vweird.f32 %v1454
        %vm1790 = vweird.f32 %v1784
        %vm1791 = vmor %vm1789, %vm1790
        %v1792 = vsel %vm1791, %v1784, %v1788
        %v1793 = vand.u32 2147483647, %v1454
        %vm1794 = vcmp.eq.f32.partialorder %v1793, 8.507059e+37
        %v1795 = vand.u32 %v1454, 2147483648
        %v1796 = vor.u32 1.1754944e-38, %v1795
        %v1797 = vsel %vm1794, %v1796, %v1792
        %v1798 = vmul.f32 1.0, %v1797
        %v1799 = vrcp.pop %v1455
        %v1800 = vmul.f32 %v1455, %v1799
        %v1801 = vsub.f32 1.0, %v1800
        %v1802 = vmul.f32 %v1799, %v1801
        %v1803 = vadd.f32 %v1799, %v1802
        %vm1804 = vweird.f32 %v1455
        %vm1805 = vweird.f32 %v1799
        %vm1806 = vmor %vm1804, %vm1805
        %v1807 = vsel %vm1806, %v1799, %v1803
        %v1808 = vand.u32 2147483647, %v1455
        %vm1809 = vcmp.eq.f32.partialorder %v1808, 8.507059e+37
        %v1810 = vand.u32 %v1455, 2147483648
        %v1811 = vor.u32 1.1754944e-38, %v1810
        %v1812 = vsel %vm1809, %v1811, %v1807
        %v1813 = vmul.f32 1.0, %v1812
        %v1814 = vrcp.pop %v1456
        %v1815 = vmul.f32 %v1456, %v1814
        %v1816 = vsub.f32 1.0, %v1815
        %v1817 = vmul.f32 %v1814, %v1816
        %v1818 = vadd.f32 %v1814, %v1817
        %vm1819 = vweird.f32 %v1456
        %vm1820 = vweird.f32 %v1814
        %vm1821 = vmor %vm1819, %vm1820
        %v1822 = vsel %vm1821, %v1814, %v1818
        %v1823 = vand.u32 2147483647, %v1456
        %vm1824 = vcmp.eq.f32.partialorder %v1823, 8.507059e+37
        %v1825 = vand.u32 %v1456, 2147483648
        %v1826 = vor.u32 1.1754944e-38, %v1825
        %v1827 = vsel %vm1824, %v1826, %v1822
        %v1828 = vmul.f32 1.0, %v1827
        %v1829 = vrcp.pop %v1457
        %v1830 = vmul.f32 %v1457, %v1829
        %v1831 = vsub.f32 1.0, %v1830
        %v1832 = vmul.f32 %v1829, %v1831
        %v1833 = vadd.f32 %v1829, %v1832
        %vm1834 = vweird.f32 %v1457
        %vm1835 = vweird.f32 %v1829
        %vm1836 = vmor %vm1834, %vm1835
        %v1837 = vsel %vm1836, %v1829, %v1833
        %v1838 = vand.u32 2147483647, %v1457
        %vm1839 = vcmp.eq.f32.partialorder %v1838, 8.507059e+37
        %v1840 = vand.u32 %v1457, 2147483648
        %v1841 = vor.u32 1.1754944e-38, %v1840
        %v1842 = vsel %vm1839, %v1841, %v1837
        %v1843 = vmul.f32 1.0, %v1842
        %v1844 = vrcp.pop %v1458
        %v1845 = vmul.f32 %v1458, %v1844
        %v1846 = vsub.f32 1.0, %v1845
        %v1847 = vmul.f32 %v1844, %v1846
        %v1848 = vadd.f32 %v1844, %v1847
        %vm1849 = vweird.f32 %v1458
        %vm1850 = vweird.f32 %v1844
        %vm1851 = vmor %vm1849, %vm1850
        %v1852 = vsel %vm1851, %v1844, %v1848
        %v1853 = vand.u32 2147483647, %v1458
        %vm1854 = vcmp.eq.f32.partialorder %v1853, 8.507059e+37
        %v1855 = vand.u32 %v1458, 2147483648
        %v1856 = vor.u32 1.1754944e-38, %v1855
        %v1857 = vsel %vm1854, %v1856, %v1852
        %v1858 = vmul.f32 1.0, %v1857
        %v1859 = vrcp.pop %v1459
        %v1860 = vmul.f32 %v1459, %v1859
        %v1861 = vsub.f32 1.0, %v1860
        %v1862 = vmul.f32 %v1859, %v1861
        %v1863 = vadd.f32 %v1859, %v1862
        %vm1864 = vweird.f32 %v1459
        %vm1865 = vweird.f32 %v1859
        %vm1866 = vmor %vm1864, %vm1865
        %v1867 = vsel %vm1866, %v1859, %v1863
        %v1868 = vand.u32 2147483647, %v1459
        %vm1869 = vcmp.eq.f32.partialorder %v1868, 8.507059e+37
        %v1870 = vand.u32 %v1459, 2147483648
        %v1871 = vor.u32 1.1754944e-38, %v1870
        %v1872 = vsel %vm1869, %v1871, %v1867
        %v1873 = vmul.f32 1.0, %v1872
        %v1874 = vrcp.pop %v1460
        %v1875 = vmul.f32 %v1460, %v1874
        %v1876 = vsub.f32 1.0, %v1875
        %v1877 = vmul.f32 %v1874, %v1876
        %v1878 = vadd.f32 %v1874, %v1877
        %vm1879 = vweird.f32 %v1460
        %vm1880 = vweird.f32 %v1874
        %vm1881 = vmor %vm1879, %vm1880
        %v1882 = vsel %vm1881, %v1874, %v1878
        %v1883 = vand.u32 2147483647, %v1460
        %vm1884 = vcmp.eq.f32.partialorder %v1883, 8.507059e+37
        %v1885 = vand.u32 %v1460, 2147483648
        %v1886 = vor.u32 1.1754944e-38, %v1885
        %v1887 = vsel %vm1884, %v1886, %v1882
        %v1888 = vmul.f32 1.0, %v1887
        %v1889 = vrcp.pop %v1461
        %v1890 = vmul.f32 %v1461, %v1889
        %v1891 = vsub.f32 1.0, %v1890
        %v1892 = vmul.f32 %v1889, %v1891
        %v1893 = vadd.f32 %v1889, %v1892
        %vm1894 = vweird.f32 %v1461
        %vm1895 = vweird.f32 %v1889
        %vm1896 = vmor %vm1894, %vm1895
        %v1897 = vsel %vm1896, %v1889, %v1893
        %v1898 = vand.u32 2147483647, %v1461
        %vm1899 = vcmp.eq.f32.partialorder %v1898, 8.507059e+37
        %v1900 = vand.u32 %v1461, 2147483648
        %v1901 = vor.u32 1.1754944e-38, %v1900
        %v1902 = vsel %vm1899, %v1901, %v1897
        %v1903 = vmul.f32 1.0, %v1902
        %v1904 = vrcp.pop %v1462
        %v1905 = vmul.f32 %v1462, %v1904
        %v1906 = vsub.f32 1.0, %v1905
        %v1907 = vmul.f32 %v1904, %v1906
        %v1908 = vadd.f32 %v1904, %v1907
        %vm1909 = vweird.f32 %v1462
        %vm1910 = vweird.f32 %v1904
        %vm1911 = vmor %vm1909, %vm1910
        %v1912 = vsel %vm1911, %v1904, %v1908
        %v1913 = vand.u32 2147483647, %v1462
        %vm1914 = vcmp.eq.f32.partialorder %v1913, 8.507059e+37
        %v1915 = vand.u32 %v1462, 2147483648
        %v1916 = vor.u32 1.1754944e-38, %v1915
        %v1917 = vsel %vm1914, %v1916, %v1912
        %v1918 = vmul.f32 1.0, %v1917
        %v1919 = vrcp.pop %v1463
        %v1920 = vmul.f32 %v1463, %v1919
        %v1921 = vsub.f32 1.0, %v1920
        %v1922 = vmul.f32 %v1919, %v1921
        %v1923 = vadd.f32 %v1919, %v1922
        %vm1924 = vweird.f32 %v1463
        %vm1925 = vweird.f32 %v1919
        %vm1926 = vmor %vm1924, %vm1925
        %v1927 = vsel %vm1926, %v1919, %v1923
        %v1928 = vand.u32 2147483647, %v1463
        %vm1929 = vcmp.eq.f32.partialorder %v1928, 8.507059e+37
        %v1930 = vand.u32 %v1463, 2147483648
        %v1931 = vor.u32 1.1754944e-38, %v1930
        %v1932 = vsel %vm1929, %v1931, %v1927
        %v1933 = vmul.f32 1.0, %v1932
        %v1934 = vrcp.pop %v1464
        %v1935 = vmul.f32 %v1464, %v1934
        %v1936 = vsub.f32 1.0, %v1935
        %v1937 = vmul.f32 %v1934, %v1936
        %v1938 = vadd.f32 %v1934, %v1937
        %vm1939 = vweird.f32 %v1464
        %vm1940 = vweird.f32 %v1934
        %vm1941 = vmor %vm1939, %vm1940
        %v1942 = vsel %vm1941, %v1934, %v1938
        %v1943 = vand.u32 2147483647, %v1464
        %vm1944 = vcmp.eq.f32.partialorder %v1943, 8.507059e+37
        %v1945 = vand.u32 %v1464, 2147483648
        %v1946 = vor.u32 1.1754944e-38, %v1945
        %v1947 = vsel %vm1944, %v1946, %v1942
        %v1948 = vmul.f32 1.0, %v1947
        %v1949 = vrcp.pop %v1465
        %v1950 = vmul.f32 %v1465, %v1949
        %v1951 = vsub.f32 1.0, %v1950
        %v1952 = vmul.f32 %v1949, %v1951
        %v1953 = vadd.f32 %v1949, %v1952
        %vm1954 = vweird.f32 %v1465
        %vm1955 = vweird.f32 %v1949
        %vm1956 = vmor %vm1954, %vm1955
        %v1957 = vsel %vm1956, %v1949, %v1953
        %v1958 = vand.u32 2147483647, %v1465
        %vm1959 = vcmp.eq.f32.partialorder %v1958, 8.507059e+37
        %v1960 = vand.u32 %v1465, 2147483648
        %v1961 = vor.u32 1.1754944e-38, %v1960
        %v1962 = vsel %vm1959, %v1961, %v1957
        %v1963 = vmul.f32 1.0, %v1962
        %v1964 = vrcp.pop %v1466
        %v1965 = vmul.f32 %v1466, %v1964
        %v1966 = vsub.f32 1.0, %v1965
        %v1967 = vmul.f32 %v1964, %v1966
        %v1968 = vadd.f32 %v1964, %v1967
        %vm1969 = vweird.f32 %v1466
        %vm1970 = vweird.f32 %v1964
        %vm1971 = vmor %vm1969, %vm1970
        %v1972 = vsel %vm1971, %v1964, %v1968
        %v1973 = vand.u32 2147483647, %v1466
        %vm1974 = vcmp.eq.f32.partialorder %v1973, 8.507059e+37
        %v1975 = vand.u32 %v1466, 2147483648
        %v1976 = vor.u32 1.1754944e-38, %v1975
        %v1977 = vsel %vm1974, %v1976, %v1972
        %v1978 = vmul.f32 1.0, %v1977
        %v1979 = vrcp.pop %v1467
        %v1980 = vmul.f32 %v1467, %v1979
        %v1981 = vsub.f32 1.0, %v1980
        %v1982 = vmul.f32 %v1979, %v1981
        %v1983 = vadd.f32 %v1979, %v1982
        %vm1984 = vweird.f32 %v1467
        %vm1985 = vweird.f32 %v1979
        %vm1986 = vmor %vm1984, %vm1985
        %v1987 = vsel %vm1986, %v1979, %v1983
        %v1988 = vand.u32 2147483647, %v1467
        %vm1989 = vcmp.eq.f32.partialorder %v1988, 8.507059e+37
        %v1990 = vand.u32 %v1467, 2147483648
        %v1991 = vor.u32 1.1754944e-38, %v1990
        %v1992 = vsel %vm1989, %v1991, %v1987
        %v1993 = vmul.f32 1.0, %v1992
        %v1994 = vrcp.pop %v1468
        %v1995 = vmul.f32 %v1468, %v1994
        %v1996 = vsub.f32 1.0, %v1995
        %v1997 = vmul.f32 %v1994, %v1996
        %v1998 = vadd.f32 %v1994, %v1997
        %vm1999 = vweird.f32 %v1468
        %vm2000 = vweird.f32 %v1994
        %vm2001 = vmor %vm1999, %vm2000
        %v2002 = vsel %vm2001, %v1994, %v1998
        %v2003 = vand.u32 2147483647, %v1468
        %vm2004 = vcmp.eq.f32.partialorder %v2003, 8.507059e+37
        %v2005 = vand.u32 %v1468, 2147483648
        %v2006 = vor.u32 1.1754944e-38, %v2005
        %v2007 = vsel %vm2004, %v2006, %v2002
        %v2008 = vmul.f32 1.0, %v2007
        %v2009 = vrcp.pop %v1469
        %v2010 = vmul.f32 %v1469, %v2009
        %v2011 = vsub.f32 1.0, %v2010
        %v2012 = vmul.f32 %v2009, %v2011
        %v2013 = vadd.f32 %v2009, %v2012
        %vm2014 = vweird.f32 %v1469
        %vm2015 = vweird.f32 %v2009
        %vm2016 = vmor %vm2014, %vm2015
        %v2017 = vsel %vm2016, %v2009, %v2013
        %v2018 = vand.u32 2147483647, %v1469
        %vm2019 = vcmp.eq.f32.partialorder %v2018, 8.507059e+37
        %v2020 = vand.u32 %v1469, 2147483648
        %v2021 = vor.u32 1.1754944e-38, %v2020
        %v2022 = vsel %vm2019, %v2021, %v2017
        %v2023 = vmul.f32 1.0, %v2022
        %v2024 = vrcp.pop %v1470
        %v2025 = vmul.f32 %v1470, %v2024
        %v2026 = vsub.f32 1.0, %v2025
        %v2027 = vmul.f32 %v2024, %v2026
        %v2028 = vadd.f32 %v2024, %v2027
        %vm2029 = vweird.f32 %v1470
        %vm2030 = vweird.f32 %v2024
        %vm2031 = vmor %vm2029, %vm2030
        %v2032 = vsel %vm2031, %v2024, %v2028
        %v2033 = vand.u32 2147483647, %v1470
        %vm2034 = vcmp.eq.f32.partialorder %v2033, 8.507059e+37
        %v2035 = vand.u32 %v1470, 2147483648
        %v2036 = vor.u32 1.1754944e-38, %v2035
        %v2037 = vsel %vm2034, %v2036, %v2032
        %v2038 = vmul.f32 1.0, %v2037
        %v2039 = vrcp.pop %v1471
        %v2040 = vmul.f32 %v1471, %v2039
        %v2041 = vsub.f32 1.0, %v2040
        %v2042 = vmul.f32 %v2039, %v2041
        %v2043 = vadd.f32 %v2039, %v2042
        %vm2044 = vweird.f32 %v1471
        %vm2045 = vweird.f32 %v2039
        %vm2046 = vmor %vm2044, %vm2045
        %v2047 = vsel %vm2046, %v2039, %v2043
        %v2048 = vand.u32 2147483647, %v1471
        %vm2049 = vcmp.eq.f32.partialorder %v2048, 8.507059e+37
        %v2050 = vand.u32 %v1471, 2147483648
        %v2051 = vor.u32 1.1754944e-38, %v2050
        %v2052 = vsel %vm2049, %v2051, %v2047
        %v2053 = vmul.f32 1.0, %v2052
        %v2054 = vrcp.pop %v1472
        %v2055 = vmul.f32 %v1472, %v2054
        %v2056 = vsub.f32 1.0, %v2055
        %v2057 = vmul.f32 %v2054, %v2056
        %v2058 = vadd.f32 %v2054, %v2057
        %vm2059 = vweird.f32 %v1472
        %vm2060 = vweird.f32 %v2054
        %vm2061 = vmor %vm2059, %vm2060
        %v2062 = vsel %vm2061, %v2054, %v2058
        %v2063 = vand.u32 2147483647, %v1472
        %vm2064 = vcmp.eq.f32.partialorder %v2063, 8.507059e+37
        %v2065 = vand.u32 %v1472, 2147483648
        %v2066 = vor.u32 1.1754944e-38, %v2065
        %v2067 = vsel %vm2064, %v2066, %v2062
        %v2068 = vmul.f32 1.0, %v2067
        %v2069 = vrcp.pop %v1473
        %v2070 = vmul.f32 %v1473, %v2069
        %v2071 = vsub.f32 1.0, %v2070
        %v2072 = vmul.f32 %v2069, %v2071
        %v2073 = vadd.f32 %v2069, %v2072
        %vm2074 = vweird.f32 %v1473
        %vm2075 = vweird.f32 %v2069
        %vm2076 = vmor %vm2074, %vm2075
        %v2077 = vsel %vm2076, %v2069, %v2073
        %v2078 = vand.u32 2147483647, %v1473
        %vm2079 = vcmp.eq.f32.partialorder %v2078, 8.507059e+37
        %v2080 = vand.u32 %v1473, 2147483648
        %v2081 = vor.u32 1.1754944e-38, %v2080
        %v2082 = vsel %vm2079, %v2081, %v2077
        %v2083 = vmul.f32 1.0, %v2082
        %v2084 = vrcp.pop %v1474
        %v2085 = vmul.f32 %v1474, %v2084
        %v2086 = vsub.f32 1.0, %v2085
        %v2087 = vmul.f32 %v2084, %v2086
        %v2088 = vadd.f32 %v2084, %v2087
        %vm2089 = vweird.f32 %v1474
        %vm2090 = vweird.f32 %v2084
        %vm2091 = vmor %vm2089, %vm2090
        %v2092 = vsel %vm2091, %v2084, %v2088
        %v2093 = vand.u32 2147483647, %v1474
        %vm2094 = vcmp.eq.f32.partialorder %v2093, 8.507059e+37
        %v2095 = vand.u32 %v1474, 2147483648
        %v2096 = vor.u32 1.1754944e-38, %v2095
        %v2097 = vsel %vm2094, %v2096, %v2092
        %v2098 = vmul.f32 1.0, %v2097
        %v2099 = vrcp.pop %v1475
        %v2100 = vmul.f32 %v1475, %v2099
        %v2101 = vsub.f32 1.0, %v2100
        %v2102 = vmul.f32 %v2099, %v2101
        %v2103 = vadd.f32 %v2099, %v2102
        %vm2104 = vweird.f32 %v1475
        %vm2105 = vweird.f32 %v2099
        %vm2106 = vmor %vm2104, %vm2105
        %v2107 = vsel %vm2106, %v2099, %v2103
        %v2108 = vand.u32 2147483647, %v1475
        %vm2109 = vcmp.eq.f32.partialorder %v2108, 8.507059e+37
        %v2110 = vand.u32 %v1475, 2147483648
        %v2111 = vor.u32 1.1754944e-38, %v2110
        %v2112 = vsel %vm2109, %v2111, %v2107
        %v2113 = vmul.f32 1.0, %v2112
        %v2114 = vrcp.pop %v1476
        %v2115 = vmul.f32 %v1476, %v2114
        %v2116 = vsub.f32 1.0, %v2115
        %v2117 = vmul.f32 %v2114, %v2116
        %v2118 = vadd.f32 %v2114, %v2117
        %vm2119 = vweird.f32 %v1476
        %vm2120 = vweird.f32 %v2114
        %vm2121 = vmor %vm2119, %vm2120
        %v2122 = vsel %vm2121, %v2114, %v2118
        %v2123 = vand.u32 2147483647, %v1476
        %vm2124 = vcmp.eq.f32.partialorder %v2123, 8.507059e+37
        %v2125 = vand.u32 %v1476, 2147483648
        %v2126 = vor.u32 1.1754944e-38, %v2125
        %v2127 = vsel %vm2124, %v2126, %v2122
        %v2128 = vmul.f32 1.0, %v2127
        %v2129 = vrcp.pop %v1477
        %v2130 = vmul.f32 %v1477, %v2129
        %v2131 = vsub.f32 1.0, %v2130
        %v2132 = vmul.f32 %v2129, %v2131
        %v2133 = vadd.f32 %v2129, %v2132
        %vm2134 = vweird.f32 %v1477
        %vm2135 = vweird.f32 %v2129
        %vm2136 = vmor %vm2134, %vm2135
        %v2137 = vsel %vm2136, %v2129, %v2133
        %v2138 = vand.u32 2147483647, %v1477
        %vm2139 = vcmp.eq.f32.partialorder %v2138, 8.507059e+37
        %v2140 = vand.u32 %v1477, 2147483648
        %v2141 = vor.u32 1.1754944e-38, %v2140
        %v2142 = vsel %vm2139, %v2141, %v2137
        %v2143 = vmul.f32 1.0, %v2142
        %v2144 = vrcp.pop %v1478
        %v2145 = vmul.f32 %v1478, %v2144
        %v2146 = vsub.f32 1.0, %v2145
        %v2147 = vmul.f32 %v2144, %v2146
        %v2148 = vadd.f32 %v2144, %v2147
        %vm2149 = vweird.f32 %v1478
        %vm2150 = vweird.f32 %v2144
        %vm2151 = vmor %vm2149, %vm2150
        %v2152 = vsel %vm2151, %v2144, %v2148
        %v2153 = vand.u32 2147483647, %v1478
        %vm2154 = vcmp.eq.f32.partialorder %v2153, 8.507059e+37
        %v2155 = vand.u32 %v1478, 2147483648
        %v2156 = vor.u32 1.1754944e-38, %v2155
        %v2157 = vsel %vm2154, %v2156, %v2152
        %v2158 = vmul.f32 1.0, %v2157
        %v2159 = vrcp.pop %v1479
        %v2160 = vmul.f32 %v1479, %v2159
        %v2161 = vsub.f32 1.0, %v2160
        %v2162 = vmul.f32 %v2159, %v2161
        %v2163 = vadd.f32 %v2159, %v2162
        %vm2164 = vweird.f32 %v1479
        %vm2165 = vweird.f32 %v2159
        %vm2166 = vmor %vm2164, %vm2165
        %v2167 = vsel %vm2166, %v2159, %v2163
        %v2168 = vand.u32 2147483647, %v1479
        %vm2169 = vcmp.eq.f32.partialorder %v2168, 8.507059e+37
        %v2170 = vand.u32 %v1479, 2147483648
        %v2171 = vor.u32 1.1754944e-38, %v2170
        %v2172 = vsel %vm2169, %v2171, %v2167
        %v2173 = vmul.f32 1.0, %v2172
        %v2174 = vrcp.pop %v1480
        %v2175 = vmul.f32 %v1480, %v2174
        %v2176 = vsub.f32 1.0, %v2175
        %v2177 = vmul.f32 %v2174, %v2176
        %v2178 = vadd.f32 %v2174, %v2177
        %vm2179 = vweird.f32 %v1480
        %vm2180 = vweird.f32 %v2174
        %vm2181 = vmor %vm2179, %vm2180
        %v2182 = vsel %vm2181, %v2174, %v2178
        %v2183 = vand.u32 2147483647, %v1480
        %vm2184 = vcmp.eq.f32.partialorder %v2183, 8.507059e+37
        %v2185 = vand.u32 %v1480, 2147483648
        %v2186 = vor.u32 1.1754944e-38, %v2185
        %v2187 = vsel %vm2184, %v2186, %v2182
        %v2188 = vmul.f32 1.0, %v2187
        %v2189 = vrcp.pop %v1481
        %v2190 = vmul.f32 %v1481, %v2189
        %v2191 = vsub.f32 1.0, %v2190
        %v2192 = vmul.f32 %v2189, %v2191
        %v2193 = vadd.f32 %v2189, %v2192
        %vm2194 = vweird.f32 %v1481
        %vm2195 = vweird.f32 %v2189
        %vm2196 = vmor %vm2194, %vm2195
        %v2197 = vsel %vm2196, %v2189, %v2193
        %v2198 = vand.u32 2147483647, %v1481
        %vm2199 = vcmp.eq.f32.partialorder %v2198, 8.507059e+37
        %v2200 = vand.u32 %v1481, 2147483648
        %v2201 = vor.u32 1.1754944e-38, %v2200
        %v2202 = vsel %vm2199, %v2201, %v2197
        %v2203 = vmul.f32 1.0, %v2202
        %v2204 = vrcp.pop %v1482
        %v2205 = vmul.f32 %v1482, %v2204
        %v2206 = vsub.f32 1.0, %v2205
        %v2207 = vmul.f32 %v2204, %v2206
        %v2208 = vadd.f32 %v2204, %v2207
        %vm2209 = vweird.f32 %v1482
        %vm2210 = vweird.f32 %v2204
        %vm2211 = vmor %vm2209, %vm2210
        %v2212 = vsel %vm2211, %v2204, %v2208
        %v2213 = vand.u32 2147483647, %v1482
        %vm2214 = vcmp.eq.f32.partialorder %v2213, 8.507059e+37
        %v2215 = vand.u32 %v1482, 2147483648
        %v2216 = vor.u32 1.1754944e-38, %v2215
        %v2217 = vsel %vm2214, %v2216, %v2212
        %v2218 = vmul.f32 1.0, %v2217
        %v2219 = vrcp.pop %v1483
        %v2220 = vmul.f32 %v1483, %v2219
        %v2221 = vsub.f32 1.0, %v2220
        %v2222 = vmul.f32 %v2219, %v2221
        %v2223 = vadd.f32 %v2219, %v2222
        %vm2224 = vweird.f32 %v1483
        %vm2225 = vweird.f32 %v2219
        %vm2226 = vmor %vm2224, %vm2225
        %v2227 = vsel %vm2226, %v2219, %v2223
        %v2228 = vand.u32 2147483647, %v1483
        %vm2229 = vcmp.eq.f32.partialorder %v2228, 8.507059e+37
        %v2230 = vand.u32 %v1483, 2147483648
        %v2231 = vor.u32 1.1754944e-38, %v2230
        %v2232 = vsel %vm2229, %v2231, %v2227
        %v2233 = vmul.f32 1.0, %v2232
        %v2234 = vrcp.pop %v1484
        %v2235 = vmul.f32 %v1484, %v2234
        %v2236 = vsub.f32 1.0, %v2235
        %v2237 = vmul.f32 %v2234, %v2236
        %v2238 = vadd.f32 %v2234, %v2237
        %vm2239 = vweird.f32 %v1484
        %vm2240 = vweird.f32 %v2234
        %vm2241 = vmor %vm2239, %vm2240
        %v2242 = vsel %vm2241, %v2234, %v2238
        %v2243 = vand.u32 2147483647, %v1484
        %vm2244 = vcmp.eq.f32.partialorder %v2243, 8.507059e+37
        %v2245 = vand.u32 %v1484, 2147483648
        %v2246 = vor.u32 1.1754944e-38, %v2245
        %v2247 = vsel %vm2244, %v2246, %v2242
        %v2248 = vmul.f32 1.0, %v2247
        %v2249 = vrcp.pop %v1485
        %v2250 = vmul.f32 %v1485, %v2249
        %v2251 = vsub.f32 1.0, %v2250
        %v2252 = vmul.f32 %v2249, %v2251
        %v2253 = vadd.f32 %v2249, %v2252
        %vm2254 = vweird.f32 %v1485
        %vm2255 = vweird.f32 %v2249
        %vm2256 = vmor %vm2254, %vm2255
        %v2257 = vsel %vm2256, %v2249, %v2253
        %v2258 = vand.u32 2147483647, %v1485
        %vm2259 = vcmp.eq.f32.partialorder %v2258, 8.507059e+37
        %v2260 = vand.u32 %v1485, 2147483648
        %v2261 = vor.u32 1.1754944e-38, %v2260
        %v2262 = vsel %vm2259, %v2261, %v2257
        %v2263 = vmul.f32 1.0, %v2262
        %v2264 = vrcp.pop %v1486
        %v2265 = vmul.f32 %v1486, %v2264
        %v2266 = vsub.f32 1.0, %v2265
        %v2267 = vmul.f32 %v2264, %v2266
        %v2268 = vadd.f32 %v2264, %v2267
        %vm2269 = vweird.f32 %v1486
        %vm2270 = vweird.f32 %v2264
        %vm2271 = vmor %vm2269, %vm2270
        %v2272 = vsel %vm2271, %v2264, %v2268
        %v2273 = vand.u32 2147483647, %v1486
        %vm2274 = vcmp.eq.f32.partialorder %v2273, 8.507059e+37
        %v2275 = vand.u32 %v1486, 2147483648
        %v2276 = vor.u32 1.1754944e-38, %v2275
        %v2277 = vsel %vm2274, %v2276, %v2272
        %v2278 = vmul.f32 1.0, %v2277
        %v2279 = vrcp.pop %v1487
        %v2280 = vmul.f32 %v1487, %v2279
        %v2281 = vsub.f32 1.0, %v2280
        %v2282 = vmul.f32 %v2279, %v2281
        %v2283 = vadd.f32 %v2279, %v2282
        %vm2284 = vweird.f32 %v1487
        %vm2285 = vweird.f32 %v2279
        %vm2286 = vmor %vm2284, %vm2285
        %v2287 = vsel %vm2286, %v2279, %v2283
        %v2288 = vand.u32 2147483647, %v1487
        %vm2289 = vcmp.eq.f32.partialorder %v2288, 8.507059e+37
        %v2290 = vand.u32 %v1487, 2147483648
        %v2291 = vor.u32 1.1754944e-38, %v2290
        %v2292 = vsel %vm2289, %v2291, %v2287
        %v2293 = vmul.f32 1.0, %v2292
        %v2294 = vrcp.pop %v1488
        %v2295 = vmul.f32 %v1488, %v2294
        %v2296 = vsub.f32 1.0, %v2295
        %v2297 = vmul.f32 %v2294, %v2296
        %v2298 = vadd.f32 %v2294, %v2297
        %vm2299 = vweird.f32 %v1488
        %vm2300 = vweird.f32 %v2294
        %vm2301 = vmor %vm2299, %vm2300
        %v2302 = vsel %vm2301, %v2294, %v2298
        %v2303 = vand.u32 2147483647, %v1488
        %vm2304 = vcmp.eq.f32.partialorder %v2303, 8.507059e+37
        %v2305 = vand.u32 %v1488, 2147483648
        %v2306 = vor.u32 1.1754944e-38, %v2305
        %v2307 = vsel %vm2304, %v2306, %v2302
        %v2308 = vmul.f32 1.0, %v2307
        %v2309 = vrcp.pop %v1489
        %v2310 = vmul.f32 %v1489, %v2309
        %v2311 = vsub.f32 1.0, %v2310
        %v2312 = vmul.f32 %v2309, %v2311
        %v2313 = vadd.f32 %v2309, %v2312
        %vm2314 = vweird.f32 %v1489
        %vm2315 = vweird.f32 %v2309
        %vm2316 = vmor %vm2314, %vm2315
        %v2317 = vsel %vm2316, %v2309, %v2313
        %v2318 = vand.u32 2147483647, %v1489
        %vm2319 = vcmp.eq.f32.partialorder %v2318, 8.507059e+37
        %v2320 = vand.u32 %v1489, 2147483648
        %v2321 = vor.u32 1.1754944e-38, %v2320
        %v2322 = vsel %vm2319, %v2321, %v2317
        %v2323 = vmul.f32 1.0, %v2322
        %v2324 = vrcp.pop %v1490
        %v2325 = vmul.f32 %v1490, %v2324
        %v2326 = vsub.f32 1.0, %v2325
        %v2327 = vmul.f32 %v2324, %v2326
        %v2328 = vadd.f32 %v2324, %v2327
        %vm2329 = vweird.f32 %v1490
        %vm2330 = vweird.f32 %v2324
        %vm2331 = vmor %vm2329, %vm2330
        %v2332 = vsel %vm2331, %v2324, %v2328
        %v2333 = vand.u32 2147483647, %v1490
        %vm2334 = vcmp.eq.f32.partialorder %v2333, 8.507059e+37
        %v2335 = vand.u32 %v1490, 2147483648
        %v2336 = vor.u32 1.1754944e-38, %v2335
        %v2337 = vsel %vm2334, %v2336, %v2332
        %v2338 = vmul.f32 1.0, %v2337
        %v2339 = vrcp.pop %v1491
        %v2340 = vmul.f32 %v1491, %v2339
        %v2341 = vsub.f32 1.0, %v2340
        %v2342 = vmul.f32 %v2339, %v2341
        %v2343 = vadd.f32 %v2339, %v2342
        %vm2344 = vweird.f32 %v1491
        %vm2345 = vweird.f32 %v2339
        %vm2346 = vmor %vm2344, %vm2345
        %v2347 = vsel %vm2346, %v2339, %v2343
        %v2348 = vand.u32 2147483647, %v1491
        %vm2349 = vcmp.eq.f32.partialorder %v2348, 8.507059e+37
        %v2350 = vand.u32 %v1491, 2147483648
        %v2351 = vor.u32 1.1754944e-38, %v2350
        %v2352 = vsel %vm2349, %v2351, %v2347
        %v2353 = vmul.f32 1.0, %v2352
        %v2354 = vrcp.pop %v1492
        %v2355 = vmul.f32 %v1492, %v2354
        %v2356 = vsub.f32 1.0, %v2355
        %v2357 = vmul.f32 %v2354, %v2356
        %v2358 = vadd.f32 %v2354, %v2357
        %vm2359 = vweird.f32 %v1492
        %vm2360 = vweird.f32 %v2354
        %vm2361 = vmor %vm2359, %vm2360
        %v2362 = vsel %vm2361, %v2354, %v2358
        %v2363 = vand.u32 2147483647, %v1492
        %vm2364 = vcmp.eq.f32.partialorder %v2363, 8.507059e+37
        %v2365 = vand.u32 %v1492, 2147483648
        %v2366 = vor.u32 1.1754944e-38, %v2365
        %v2367 = vsel %vm2364, %v2366, %v2362
        %v2368 = vmul.f32 1.0, %v2367
        %v2369 = vrcp.pop %v1493
        %v2370 = vmul.f32 %v1493, %v2369
        %v2371 = vsub.f32 1.0, %v2370
        %v2372 = vmul.f32 %v2369, %v2371
        %v2373 = vadd.f32 %v2369, %v2372
        %vm2374 = vweird.f32 %v1493
        %vm2375 = vweird.f32 %v2369
        %vm2376 = vmor %vm2374, %vm2375
        %v2377 = vsel %vm2376, %v2369, %v2373
        %v2378 = vand.u32 2147483647, %v1493
        %vm2379 = vcmp.eq.f32.partialorder %v2378, 8.507059e+37
        %v2380 = vand.u32 %v1493, 2147483648
        %v2381 = vor.u32 1.1754944e-38, %v2380
        %v2382 = vsel %vm2379, %v2381, %v2377
        %v2383 = vmul.f32 1.0, %v2382
        %v2384 = vrcp.pop %v1494
        %v2385 = vmul.f32 %v1494, %v2384
        %v2386 = vsub.f32 1.0, %v2385
        %v2387 = vmul.f32 %v2384, %v2386
        %v2388 = vadd.f32 %v2384, %v2387
        %vm2389 = vweird.f32 %v1494
        %vm2390 = vweird.f32 %v2384
        %vm2391 = vmor %vm2389, %vm2390
        %v2392 = vsel %vm2391, %v2384, %v2388
        %v2393 = vand.u32 2147483647, %v1494
        %vm2394 = vcmp.eq.f32.partialorder %v2393, 8.507059e+37
        %v2395 = vand.u32 %v1494, 2147483648
        %v2396 = vor.u32 1.1754944e-38, %v2395
        %v2397 = vsel %vm2394, %v2396, %v2392
        %v2398 = vmul.f32 1.0, %v2397
        %v2399 = vrcp.pop %v1495
        %v2400 = vmul.f32 %v1495, %v2399
        %v2401 = vsub.f32 1.0, %v2400
        %v2402 = vmul.f32 %v2399, %v2401
        %v2403 = vadd.f32 %v2399, %v2402
        %vm2404 = vweird.f32 %v1495
        %vm2405 = vweird.f32 %v2399
        %vm2406 = vmor %vm2404, %vm2405
        %v2407 = vsel %vm2406, %v2399, %v2403
        %v2408 = vand.u32 2147483647, %v1495
        %vm2409 = vcmp.eq.f32.partialorder %v2408, 8.507059e+37
        %v2410 = vand.u32 %v1495, 2147483648
        %v2411 = vor.u32 1.1754944e-38, %v2410
        %v2412 = vsel %vm2409, %v2411, %v2407
        %v2413 = vmul.f32 1.0, %v2412
        %v2414 = vrcp.pop %v1496
        %v2415 = vmul.f32 %v1496, %v2414
        %v2416 = vsub.f32 1.0, %v2415
        %v2417 = vmul.f32 %v2414, %v2416
        %v2418 = vadd.f32 %v2414, %v2417
        %vm2419 = vweird.f32 %v1496
        %vm2420 = vweird.f32 %v2414
        %vm2421 = vmor %vm2419, %vm2420
        %v2422 = vsel %vm2421, %v2414, %v2418
        %v2423 = vand.u32 2147483647, %v1496
        %vm2424 = vcmp.eq.f32.partialorder %v2423, 8.507059e+37
        %v2425 = vand.u32 %v1496, 2147483648
        %v2426 = vor.u32 1.1754944e-38, %v2425
        %v2427 = vsel %vm2424, %v2426, %v2422
        %v2428 = vmul.f32 1.0, %v2427
        %v2429 = vrcp.pop %v1497
        %v2430 = vmul.f32 %v1497, %v2429
        %v2431 = vsub.f32 1.0, %v2430
        %v2432 = vmul.f32 %v2429, %v2431
        %v2433 = vadd.f32 %v2429, %v2432
        %vm2434 = vweird.f32 %v1497
        %vm2435 = vweird.f32 %v2429
        %vm2436 = vmor %vm2434, %vm2435
        %v2437 = vsel %vm2436, %v2429, %v2433
        %v2438 = vand.u32 2147483647, %v1497
        %vm2439 = vcmp.eq.f32.partialorder %v2438, 8.507059e+37
        %v2440 = vand.u32 %v1497, 2147483648
        %v2441 = vor.u32 1.1754944e-38, %v2440
        %v2442 = vsel %vm2439, %v2441, %v2437
        %v2443 = vmul.f32 1.0, %v2442
        %v2444 = vrcp.pop %v1498
        %v2445 = vmul.f32 %v1498, %v2444
        %v2446 = vsub.f32 1.0, %v2445
        %v2447 = vmul.f32 %v2444, %v2446
        %v2448 = vadd.f32 %v2444, %v2447
        %vm2449 = vweird.f32 %v1498
        %vm2450 = vweird.f32 %v2444
        %vm2451 = vmor %vm2449, %vm2450
        %v2452 = vsel %vm2451, %v2444, %v2448
        %v2453 = vand.u32 2147483647, %v1498
        %vm2454 = vcmp.eq.f32.partialorder %v2453, 8.507059e+37
        %v2455 = vand.u32 %v1498, 2147483648
        %v2456 = vor.u32 1.1754944e-38, %v2455
        %v2457 = vsel %vm2454, %v2456, %v2452
        %v2458 = vmul.f32 1.0, %v2457
        %2459 = vst [vmem:[%s299] sm:$0xff] %v1513
        %2460 = vst [vmem:[%s299 + $0x8] sm:$0xff] %v1528
        %2461 = vst [vmem:[%s299 + $0x10] sm:$0xff] %v1543
        %2462 = vst [vmem:[%s299 + $0x18] sm:$0xff] %v1558
        %2463 = vst [vmem:[%s299 + $0x20] sm:$0xff] %v1573
        %2464 = vst [vmem:[%s299 + $0x28] sm:$0xff] %v1588
        %2465 = vst [vmem:[%s299 + $0x30] sm:$0xff] %v1603
        %2466 = vst [vmem:[%s299 + $0x38] sm:$0xff] %v1618
        %2467 = vst [vmem:[%s299 + $0x40] sm:$0xff] %v1633
        %2468 = vst [vmem:[%s299 + $0x48] sm:$0xff] %v1648
        %2469 = vst [vmem:[%s299 + $0x50] sm:$0xff] %v1663
        %2470 = vst [vmem:[%s299 + $0x58] sm:$0xff] %v1678
        %2471 = vst [vmem:[%s299 + $0x60] sm:$0xff] %v1693
        %2472 = vst [vmem:[%s299 + $0x68] sm:$0xff] %v1708
        %2473 = vst [vmem:[%s299 + $0x70] sm:$0xff] %v1723
        %2474 = vst [vmem:[%s299 + $0x78] sm:$0xff] %v1738
        %2475 = vst [vmem:[%s299 + $0x80] sm:$0xff] %v1753
        %2476 = vst [vmem:[%s299 + $0x88] sm:$0xff] %v1768
        %2477 = vst [vmem:[%s299 + $0x90] sm:$0xff] %v1783
        %2478 = vst [vmem:[%s299 + $0x98] sm:$0xff] %v1798
        %2479 = vst [vmem:[%s299 + $0xa0] sm:$0xff] %v1813
        %2480 = vst [vmem:[%s299 + $0xa8] sm:$0xff] %v1828
        %2481 = vst [vmem:[%s299 + $0xb0] sm:$0xff] %v1843
        %2482 = vst [vmem:[%s299 + $0xb8] sm:$0xff] %v1858
        %2483 = vst [vmem:[%s299 + $0xc0] sm:$0xff] %v1873
        %2484 = vst [vmem:[%s299 + $0xc8] sm:$0xff] %v1888
        %2485 = vst [vmem:[%s299 + $0xd0] sm:$0xff] %v1903
        %2486 = vst [vmem:[%s299 + $0xd8] sm:$0xff] %v1918
        %2487 = vst [vmem:[%s299 + $0xe0] sm:$0xff] %v1933
        %2488 = vst [vmem:[%s299 + $0xe8] sm:$0xff] %v1948
        %2489 = vst [vmem:[%s299 + $0xf0] sm:$0xff] %v1963
        %2490 = vst [vmem:[%s299 + $0xf8] sm:$0xff] %v1978
        %2491 = vst [vmem:[%s299 + $0x100] sm:$0xff] %v1993
        %2492 = vst [vmem:[%s299 + $0x108] sm:$0xff] %v2008
        %2493 = vst [vmem:[%s299 + $0x110] sm:$0xff] %v2023
        %2494 = vst [vmem:[%s299 + $0x118] sm:$0xff] %v2038
        %2495 = vst [vmem:[%s299 + $0x120] sm:$0xff] %v2053
        %2496 = vst [vmem:[%s299 + $0x128] sm:$0xff] %v2068
        %2497 = vst [vmem:[%s299 + $0x130] sm:$0xff] %v2083
        %2498 = vst [vmem:[%s299 + $0x138] sm:$0xff] %v2098
        %2499 = vst [vmem:[%s299 + $0x140] sm:$0xff] %v2113
        %2500 = vst [vmem:[%s299 + $0x148] sm:$0xff] %v2128
        %2501 = vst [vmem:[%s299 + $0x150] sm:$0xff] %v2143
        %2502 = vst [vmem:[%s299 + $0x158] sm:$0xff] %v2158
        %2503 = vst [vmem:[%s299 + $0x160] sm:$0xff] %v2173
        %2504 = vst [vmem:[%s299 + $0x168] sm:$0xff] %v2188
        %2505 = vst [vmem:[%s299 + $0x170] sm:$0xff] %v2203
        %2506 = vst [vmem:[%s299 + $0x178] sm:$0xff] %v2218
        %2507 = vst [vmem:[%s299 + $0x180] sm:$0xff] %v2233
        %2508 = vst [vmem:[%s299 + $0x188] sm:$0xff] %v2248
        %2509 = vst [vmem:[%s299 + $0x190] sm:$0xff] %v2263
        %2510 = vst [vmem:[%s299 + $0x198] sm:$0xff] %v2278
        %2511 = vst [vmem:[%s299 + $0x1a0] sm:$0xff] %v2293
        %2512 = vst [vmem:[%s299 + $0x1a8] sm:$0xff] %v2308
        %2513 = vst [vmem:[%s299 + $0x1b0] sm:$0xff] %v2323
        %2514 = vst [vmem:[%s299 + $0x1b8] sm:$0xff] %v2338
        %2515 = vst [vmem:[%s299 + $0x1c0] sm:$0xff] %v2353
        %2516 = vst [vmem:[%s299 + $0x1c8] sm:$0xff] %v2368
        %2517 = vst [vmem:[%s299 + $0x1d0] sm:$0xff] %v2383
        %2518 = vst [vmem:[%s299 + $0x1d8] sm:$0xff] %v2398
        %2519 = vst [vmem:[%s299 + $0x1e0] sm:$0xff] %v2413
        %2520 = vst [vmem:[%s299 + $0x1e8] sm:$0xff] %v2428
        %2521 = vst [vmem:[%s299 + $0x1f0] sm:$0xff] %v2443
        %2522 = vst [vmem:[%s299 + $0x1f8] sm:$0xff] %v2458
        %s2523 = sand.u32 %s184, 1
        %s2524 = scalar_lea.sflag [#allocation4], %s2523
        %s2525 = sand.u32 %s184, 1
        %s2526 = smul.addr %s2525, 512
        %s2527 = scalar_lea.vmem [#allocation5], %s2526
        // Predicated region
        $region53: #{tpu_custom_call.1} parent=47 // pred_check
          %p2528 = pneg %p194
        $region54: #{tpu_custom_call.1} parent=47 // pred_check_branch
          %2530 = sbr.rel (%p2528) target = $region56
        $region55: #{tpu_custom_call.1} parent=47 // pred_region
          %s2531 = smul.u32 32, %s24
          %2533 = vsyncadd %s2524, 0
          %s2534 = smul.addr %s2531, 2
          %s2535 = smul.addr %s2534, 8
          %s2536 = scalar_lea.hbm %s7, %s2535
          %s2537 = sshll.u32 %s2527, 4
          %s2538 = int_to_ptr.vmem [resolvable:$true] %s2537
          %s2539 = sshll.u32 %s2536, 4
          %s2540 = int_to_ptr.hbm [resolvable:$true] %s2539
          %2545 = dma.vmem_to_hbm [thread:$0]  %s2538, 8192, %s2540, %s2524, 256, 256, 16
        $region56: #{tpu_custom_call.1} parent=47 // pred_fallthru
          _
      $region48: #{tpu_custom_call.1} parent=5 // pred_fallthru
        _
      %p2546 = scmp.le.s32.totalorder 2, %s19
      // Predicated region
      $region57: #{tpu_custom_call.1} parent=5 // pred_check
        %p2547 = pneg %p2546
      $region58: #{tpu_custom_call.1} parent=5 // pred_check_branch
        %2549 = sbr.rel (%p2547) target = $region60
      $region59: #{tpu_custom_call.1} parent=5 // pred_region
        %s2550 = ssub.s32 %s19, 2
        // Predicated region
        $region61: #{tpu_custom_call.1} parent=59 // pred_check
          %p2551 = pneg %p200
        $region62: #{tpu_custom_call.1} parent=59 // pred_check_branch
          %2553 = sbr.rel (%p2551) target = $region64
        $region63: #{tpu_custom_call.1} parent=59 // pred_region
          %s2554 = sand.u32 %s185, 1
          %s2555 = scalar_lea.sflag [#allocation4], %s2554
          %s2556 = sand.u32 %s185, 1
          %s2557 = smul.addr %s2556, 512
          %s2558 = scalar_lea.vmem [#allocation5], %s2557
          %2560 = dma.done %s2555, 8192
        $region64: #{tpu_custom_call.1} parent=59 // pred_fallthru
          _
      $region60: #{tpu_custom_call.1} parent=5 // pred_fallthru
        _
    $region6: #{tpu_custom_call.1} parent=1 // loop_footer
      %s23 = sadd.s32 1, %s19
    $region7: #{tpu_custom_call.1} parent=1 // loop_footer_branch
      %18 = sbr.rel target = $region3
    $region8: #{tpu_custom_call.1} parent=1 // loop_exit
      _
    %2561 = vsyncpa [#allocation3], 1
    %s2562 = scalar_lea.sflag [#allocation3], 1
    %2563 = vsyncpa %s2562, 1
    %2564 = vsyncpa [#allocation4], 1
    %s2565 = scalar_lea.sflag [#allocation4], 1
    %2566 = vsyncpa %s2565, 1

</llo_original>
